<compile_context>
chip_gen: v7x
topology: tpu7x:2x2x1
jax: 0.10.0
libtpu: 0.0.40
codegen_flags: <defaults>
</compile_context>

<pallas_src>
import math
from functools import partial

import numpy as np
import jax
import jax.numpy as jnp
from jax.experimental import pallas as pl
from jax.experimental.pallas import tpu as pltpu


def _silu(x):
    return x * jax.nn.sigmoid(x)


def _round_up(x, m):
    return ((x + m - 1) // m) * m


def _pad(x, shape):
    return jnp.pad(x, [(0, s - d) for d, s in zip(x.shape, shape)])


def _full_spec(shape):
    nd = len(shape)
    return pl.BlockSpec(shape, lambda i, nd=nd: (0,) * nd)


# ----------------------------------------------------------------------------
# Single fused kernel: encoder projection -> postpool -> posterior_m (unique
# rows) -> exact one-hot leave-one-out gather (MXU) -> posterior_c / prior +
# rsamples (duplicated rows).  All tensors lane-dense (Hp / C1 / 2*Hp wide).
# ----------------------------------------------------------------------------
def vfs_fused(xm, g, e1, e2, kp, Hp, C1, s0, Np):
    Mp = g.shape[0]

    def kernel(xm_ref, g_ref, e1_ref, e2_ref,
               wenc_ref, wsq_ref, wmlv_ref, wc1_ref, wc2_ref, bias_ref,
               c_ref, stats_ref):
        f32 = jnp.float32
        bf16 = jnp.bfloat16
        b = bias_ref[...]                                  # (8, 2*Hp) f32

        # ---- noise-independent stage: unique (bs*ns) rows ------------------
        # encoder (ViT stand-in: patch-mean projection; mean done in wrapper)
        hc = jnp.dot(xm_ref[...], wenc_ref[...],
                     preferred_element_type=f32) + b[0:1, :Hp]
        hcb = hc.astype(bf16)
        # TODO(synk): Memory module is external; identity read mc = hc stand-in.
        # postpool(SiLU, Linear(2H->H)) on cat(mc, hc) with mc == hc reduces to
        # silu(hc) @ (Wpp[:H] + Wpp[H:])  (pre-summed in the wrapper).
        z = jnp.dot(_silu(hc).astype(bf16), wsq_ref[0],
                    preferred_element_type=f32) + b[1:2, :Hp]
        # posterior_m: Linear -> SiLU -> merged mean/logvar Linear (2*Hp wide)
        t1 = jnp.dot(z.astype(bf16), wsq_ref[1],
                     preferred_element_type=f32) + b[2:3, :Hp]
        a1 = _silu(t1).astype(bf16)
        qmv_u = jnp.dot(a1, wmlv_ref[0], preferred_element_type=f32) + b[3:4, :]
        # hc contribution to posterior_c's first layer (noise-independent)
        h2_u = jnp.dot(hcb, wc1_ref[1], preferred_element_type=f32)

        # ---- exact leave-one-out gather: one-hot f32 matmul on the MXU -----
        g_ = g_ref[...]                                    # (Mp, Rp) one-hot
        qmv = jnp.dot(g_, qmv_u, preferred_element_type=f32)   # (Mp, 2*Hp)
        h2 = jnp.dot(g_, h2_u, preferred_element_type=f32)     # (Mp, C1)

        qm = qmv[:, :Hp]
        qv = qmv[:, Hp:]
        m = qm + jnp.exp(qv * 0.5) * e1_ref[...]           # rsample of q(m)
        mb = m.astype(bf16)

        # posterior_c on cat(m, hc): concat removed via input-split weights
        t2 = (jnp.dot(mb, wc1_ref[0], preferred_element_type=f32)
              + h2 + b[4:5, :C1])
        a2 = _silu(t2).astype(bf16)
        cmv = jnp.dot(a2, wc2_ref[...], preferred_element_type=f32) + b[5:6, :]
        cqm = cmv[:, :Hp]
        cqv = cmv[:, Hp:]

        # prior on m
        t3 = jnp.dot(mb, wsq_ref[2], preferred_element_type=f32) + b[6:7, :Hp]
        a3 = _silu(t3).astype(bf16)
        pmv = jnp.dot(a3, wmlv_ref[1], preferred_element_type=f32) + b[7:8, :]
        cpm = pmv[:, :Hp]
        cpv = pmv[:, Hp:]

        c_ref[...] = cqm + jnp.exp(cqv * 0.5) * e2_ref[...]   # rsample of q(c)

        # ---- sublane-aligned stats writeback (last leave-one-out subset) ---
        # s0 and Np are multiples of 8; lanes are full width -> unmasked vst.
        stats_ref[0 * Np:1 * Np] = qm[s0:s0 + Np]
        stats_ref[1 * Np:2 * Np] = qv[s0:s0 + Np]
        stats_ref[2 * Np:3 * Np] = cqm[s0:s0 + Np]
        stats_ref[3 * Np:4 * Np] = cqv[s0:s0 + Np]
        stats_ref[4 * Np:5 * Np] = cpm[s0:s0 + Np]
        stats_ref[5 * Np:6 * Np] = cpv[s0:s0 + Np]

    args = [xm, g, e1, e2,
            kp["w_enc"], kp["wsq"], kp["wmlv"], kp["wc1"], kp["wc2"], kp["bias"]]
    out_shape = (jax.ShapeDtypeStruct((Mp, Hp), jnp.float32),
                 jax.ShapeDtypeStruct((6 * Np, Hp), jnp.float32))
    # TODO(synk): at this size everything fits one invocation; if M or Hp grow,
    # switch to a row-tiled "parallel" grid (bounds VMEM, shards rows across
    # v7x's 2 TensorCores) and re-derive the tile for v7x's 64 MiB VMEM.
    return pl.pallas_call(
        kernel,
        out_shape=out_shape,
        grid=(1,),
        in_specs=[_full_spec(a.shape) for a in args],
        out_specs=(_full_spec((Mp, Hp)), _full_spec((6 * Np, Hp))),
        compiler_params=pltpu.CompilerParams(dimension_semantics=("arbitrary",)),
    )(*args)


# ----------------------------------------------------------------------------
# Parameter init (deterministic, synthetic) — logical shapes follow
# VFSDDPM.__init__.  Linear weights stored as (in, out): y = x @ W + b.
# ----------------------------------------------------------------------------
def init_params(key, ch, img, patch, hdim):
    D = ch * patch * patch
    H = hdim
    shapes = {
        "wp":  (D, H),         "bp":  (1, H),         # encoder projection (ViT stand-in)
        "wpp": (2 * H, H),     "bpp": (1, H),         # postpool
        "wm1": (H, H),         "bm1": (1, H),         # posterior_m
        "wm2": (H, 2 * H),     "bm2": (1, 2 * H),
        "wc1": (2 * H, 2 * H), "bc1": (1, 2 * H),     # posterior_c
        "wc2": (2 * H, 2 * H), "bc2": (1, 2 * H),
        "wq1": (H, H),         "bq1": (1, H),         # prior
        "wq2": (H, 2 * H),     "bq2": (1, 2 * H),
    }
    params = {}
    keys = jax.random.split(key, len(shapes))
    for k, (name, shp) in zip(keys, shapes.items()):
        if name.startswith("b"):
            params[name] = jnp.zeros(shp, jnp.float32)
        else:
            params[name] = 0.05 * jax.random.normal(k, shp, jnp.float32)
    return params


def prepare_kernel_params(p, ch, patch, hdim):
    """One-time (hoisted) prep: split / pre-sum / zero-pad logical params into
    packed, lane-dense kernel tensors.  Weights bf16 (MXU operands), biases
    f32.  Zero padding keeps the first H (resp. 2H) columns bit-exact."""
    H = hdim
    Hp = _round_up(H, 128)
    C1 = _round_up(2 * H, 128)       # posterior_c hidden width (lane-dense)
    D = ch * patch * patch
    Dp = _round_up(D, 128)
    bf = jnp.bfloat16

    def split_mlv(w):
        # (rows, 2H) -> (rows, 2Hp): mean at cols [0,H), logvar at [Hp, Hp+H)
        mean = _pad(w[:, :H], (w.shape[0], Hp))
        logv = _pad(w[:, H:], (w.shape[0], Hp))
        return jnp.concatenate([mean, logv], axis=1)

    kp = {}
    kp["w_enc"] = _pad(p["wp"], (Dp, Hp)).astype(bf)                 # (Dp, Hp)
    kp["wsq"] = jnp.stack([                                          # (3, Hp, Hp)
        _pad(p["wpp"][:H] + p["wpp"][H:], (Hp, Hp)),  # postpool, mc == hc pre-sum
        _pad(p["wm1"], (Hp, Hp)),
        _pad(p["wq1"], (Hp, Hp)),
    ]).astype(bf)
    kp["wmlv"] = jnp.stack([                                         # (2, Hp, 2Hp)
        _pad(split_mlv(p["wm2"]), (Hp, 2 * Hp)),
        _pad(split_mlv(p["wq2"]), (Hp, 2 * Hp)),
    ]).astype(bf)
    kp["wc1"] = jnp.stack([                                          # (2, Hp, C1)
        _pad(p["wc1"][:H, :], (Hp, C1)),   # m rows of cat(m, hc)
        _pad(p["wc1"][H:, :], (Hp, C1)),   # hc rows of cat(m, hc)
    ]).astype(bf)
    kp["wc2"] = _pad(split_mlv(p["wc2"]), (C1, 2 * Hp)).astype(bf)   # (C1, 2Hp)
    kp["bias"] = jnp.concatenate([                                   # (8, 2Hp) f32
        _pad(p["bp"],  (1, 2 * Hp)),
        _pad(p["bpp"], (1, 2 * Hp)),
        _pad(p["bm1"], (1, 2 * Hp)),
        split_mlv(p["bm2"]),
        _pad(p["bc1"], (1, 2 * Hp)),
        split_mlv(p["bc2"]),
        _pad(p["bq1"], (1, 2 * Hp)),
        split_mlv(p["bq2"]),
    ], axis=0).astype(jnp.float32)
    return kp


# ----------------------------------------------------------------------------
# Forward (mirrors VFSDDPM.forward leave-one-out loop + loss_c / loss_m)
# ----------------------------------------------------------------------------
def patchify(batch, patch):
    bs, ns, ch, Hh, Ww = batch.shape
    hp, wp = Hh // patch, Ww // patch
    x = batch.reshape(bs * ns, ch, hp, patch, wp, patch)
    x = jnp.transpose(x, (0, 2, 4, 1, 3, 5))             # (R, hp, wp, ch, p, p)
    return x.reshape(bs * ns, hp * wp, ch * patch * patch)   # (R, P, D)


@partial(jax.jit, static_argnames=("patch", "hdim"))
def vfsddpm_forward(kp, batch, eps1, eps2, *, patch, hdim):
    bs, ns, ch, img, _ = batch.shape
    H = hdim
    Hp = _round_up(H, 128)
    C1 = _round_up(2 * H, 128)
    D = ch * patch * patch
    Dp = _round_up(D, 128)
    R = bs * ns
    Rp = _round_up(R, 8)
    N = bs * (ns - 1)
    M = ns * N
    Mp = _round_up(M, 8)

    # ---- ViT stand-in front end: patchify + patch-mean (fused under jit) ----
    # TODO(synk): the real ViT transformer (depth=6, heads=12) and the
    #             time-embedding path are external; patch-mean projection used.
    xm = jnp.mean(patchify(batch, patch), axis=1)        # (R, D)
    xm = _pad(xm, (Rp, Dp)).astype(jnp.bfloat16)

    # ---- one-hot leave-one-out gather matrix (trace-time constant) ----
    gnp = np.zeros((Mp, Rp), np.float32)
    row = 0
    for i in range(ns):
        for bb in range(bs):
            for k in range(ns):
                if k != i:
                    gnp[row, bb * ns + k] = 1.0
                    row += 1
    g = jnp.asarray(gnp)

    e1 = _pad(eps1.reshape(M, H), (Mp, Hp))
    e2 = _pad(eps2.reshape(M, H), (Mp, Hp))

    # 8-aligned stats window covering the last leave-one-out subset's N rows.
    s0 = ((M - N) // 8) * 8
    Np = _round_up(M - s0, 8)
    off = (M - N) - s0

    # ---- fused Pallas kernel: ONE launch for the whole context path ----
    c_pad, stats = vfs_fused(xm, g, e1, e2, kp, Hp, C1, s0, Np)

    # ---- assemble c like forward(): (bs*ns, ns-1, H) ('lag' conditioning) ----
    c = c_pad[:M, :H].reshape(ns, bs, ns - 1, H)
    c_lag = jnp.transpose(c, (1, 0, 2, 3)).reshape(bs * ns, ns - 1, H)

    # ---- losses use `out` of the LAST loop iteration (i = ns-1), as in torch ----
    st = stats.reshape(6, Np, Hp)[:, off:off + N, :H]    # (6, N, H)
    qm_l, qv_l, cqm_l, cqv_l, cpm_l, cpv_l = (st[k] for k in range(6))

    def rb(x):
        return x.reshape(bs, ns - 1, H)

    # KL( N(cqm, exp(cqv/2)) || N(cpm, exp(cpv/2)) )
    klc_el = (0.5 * (cpv_l - cqv_l)
              + (jnp.exp(cqv_l) + (cqm_l - cpm_l) ** 2) / (2.0 * jnp.exp(cpv_l))
              - 0.5)
    # KL( N(qm, exp(qv/2)) || N(0, 1) )
    klm_el = -0.5 * qv_l + 0.5 * (jnp.exp(qv_l) + qm_l ** 2) - 0.5

    klc = jnp.mean(rb(klc_el), axis=(1, 2)) / math.log(2.0)
    klm = jnp.mean(rb(klm_el), axis=(1, 2)) / math.log(2.0)

    # TODO(synk): diffusion.training_losses(generative_model, x, t, c) is an
    #             external UNet+diffusion; not reproducible from this module.
    return {"c": c_lag, "klc": klc, "klm": klm}


if __name__ == "__main__":
    bs, ns, ch, img, patch, hdim = 2, 8, 4, 16, 4, 32
    N = bs * (ns - 1)

    key = jax.random.PRNGKey(0)
    kx, kw, ke1, ke2 = jax.random.split(key, 4)

    batch = jax.random.normal(kx, (bs, ns, ch, img, img), jnp.float32)
    params = init_params(kw, ch, img, patch, hdim)
    eps1 = jax.random.normal(ke1, (ns, N, hdim), jnp.float32)
    eps2 = jax.random.normal(ke2, (ns, N, hdim), jnp.float32)

    # one-time (hoisted) weight prep: pad / split / pack for the kernel
    kp = prepare_kernel_params(params, ch, patch, hdim)

    out = vfsddpm_forward(kp, batch, eps1, eps2, patch=patch, hdim=hdim)
    jax.block_until_ready(out)

    assert out["c"].shape == (bs * ns, ns - 1, hdim)
    assert out["klc"].shape == (bs,)
    assert out["klm"].shape == (bs,)
    assert bool(jnp.all(jnp.isfinite(out["c"])))
    assert bool(jnp.all(jnp.isfinite(out["klc"])))
    assert bool(jnp.all(jnp.isfinite(out["klm"])))
    print("KERNEL_OK")
</pallas_src>

<mosaic_0001>
module attributes {stable_mosaic.version = 11 : i64} {
  func.func @kernel(%arg0: i32, %arg1: memref<16x128xbf16, #tpu.memory_space<vmem>>, %arg2: memref<112x16xf32, #tpu.memory_space<vmem>>, %arg3: memref<112x128xf32, #tpu.memory_space<vmem>>, %arg4: memref<112x128xf32, #tpu.memory_space<vmem>>, %arg5: memref<128x128xbf16, #tpu.memory_space<vmem>>, %arg6: memref<3x128x128xbf16, #tpu.memory_space<vmem>>, %arg7: memref<2x128x256xbf16, #tpu.memory_space<vmem>>, %arg8: memref<2x128x128xbf16, #tpu.memory_space<vmem>>, %arg9: memref<128x256xbf16, #tpu.memory_space<vmem>>, %arg10: memref<8x256xf32, #tpu.memory_space<vmem>>, %arg11: memref<112x128xf32, #tpu.memory_space<vmem>>, %arg12: memref<96x128xf32, #tpu.memory_space<vmem>>) attributes {dimension_semantics = [#tpu.dimension_semantics<arbitrary>], iteration_bounds = array<i64: 1>, scalar_prefetch = 0 : i64, scratch_operands = 0 : i64, tpu.core_type = #tpu.core_type<tc>, window_params = [{pipeline_mode = #tpu.pipeline_mode<synchronous>, transform_indices = @transform_0, window_bounds = array<i64: 16, 128>}, {pipeline_mode = #tpu.pipeline_mode<synchronous>, transform_indices = @transform_1, window_bounds = array<i64: 112, 16>}, {pipeline_mode = #tpu.pipeline_mode<synchronous>, transform_indices = @transform_2, window_bounds = array<i64: 112, 128>}, {pipeline_mode = #tpu.pipeline_mode<synchronous>, transform_indices = @transform_3, window_bounds = array<i64: 112, 128>}, {pipeline_mode = #tpu.pipeline_mode<synchronous>, transform_indices = @transform_4, window_bounds = array<i64: 128, 128>}, {pipeline_mode = #tpu.pipeline_mode<synchronous>, transform_indices = @transform_5, window_bounds = array<i64: 3, 128, 128>}, {pipeline_mode = #tpu.pipeline_mode<synchronous>, transform_indices = @transform_6, window_bounds = array<i64: 2, 128, 256>}, {pipeline_mode = #tpu.pipeline_mode<synchronous>, transform_indices = @transform_7, window_bounds = array<i64: 2, 128, 128>}, {pipeline_mode = #tpu.pipeline_mode<synchronous>, transform_indices = @transform_8, window_bounds = array<i64: 128, 256>}, {pipeline_mode = #tpu.pipeline_mode<synchronous>, transform_indices = @transform_9, window_bounds = array<i64: 8, 256>}, {pipeline_mode = #tpu.pipeline_mode<synchronous>, transform_indices = @transform_10, window_bounds = array<i64: 112, 128>}, {pipeline_mode = #tpu.pipeline_mode<synchronous>, transform_indices = @transform_11, window_bounds = array<i64: 96, 128>}]} {
    %c0 = arith.constant 0 : index
    %c0_0 = arith.constant 0 : index
    %0 = vector.load %arg10[%c0, %c0_0] : memref<8x256xf32, #tpu.memory_space<vmem>>, vector<8x256xf32>
    %c0_1 = arith.constant 0 : index
    %c0_2 = arith.constant 0 : index
    %1 = vector.load %arg1[%c0_1, %c0_2] : memref<16x128xbf16, #tpu.memory_space<vmem>>, vector<16x128xbf16>
    %c0_3 = arith.constant 0 : index
    %c0_4 = arith.constant 0 : index
    %2 = vector.load %arg5[%c0_3, %c0_4] : memref<128x128xbf16, #tpu.memory_space<vmem>>, vector<128x128xbf16>
    %cst = arith.constant dense<0.000000e+00> : vector<16x128xf32>
    %3 = tpu.matmul %1, %2, %cst {dimension_numbers = #tpu.dot_dimension_numbers<[1], [0], [0], [1], [0, 0, 1, 1], [], []>} : vector<16x128xbf16>, vector<128x128xbf16>, vector<16x128xf32> -> vector<16x128xf32>
    %4 = vector.extract_strided_slice %0 {offsets = [0, 0], sizes = [1, 128], strides = [1, 1]} : vector<8x256xf32> to vector<1x128xf32>
    %5 = vector.broadcast %4 : vector<1x128xf32> to vector<16x128xf32>
    %6 = arith.addf %3, %5 : vector<16x128xf32>
    %7 = arith.truncf %6 : vector<16x128xf32> to vector<16x128xbf16>
    %8 = arith.negf %6 : vector<16x128xf32>
    %9 = math.exp %8 : vector<16x128xf32>
    %cst_5 = arith.constant 1.000000e+00 : f32
    %10 = vector.broadcast %cst_5 : f32 to vector<16x128xf32>
    %11 = arith.addf %10, %9 : vector<16x128xf32>
    %12 = arith.divf %10, %11 : vector<16x128xf32>
    %13 = arith.mulf %6, %12 : vector<16x128xf32>
    %14 = arith.truncf %13 : vector<16x128xf32> to vector<16x128xbf16>
    %c0_6 = arith.constant 0 : index
    %c0_7 = arith.constant 0 : index
    %c0_8 = arith.constant 0 : index
    %15 = vector.load %arg6[%c0_6, %c0_7, %c0_8] : memref<3x128x128xbf16, #tpu.memory_space<vmem>>, vector<1x128x128xbf16>
    %16 = vector.shape_cast %15 : vector<1x128x128xbf16> to vector<128x128xbf16>
    %cst_9 = arith.constant dense<0.000000e+00> : vector<16x128xf32>
    %17 = tpu.matmul %14, %16, %cst_9 {dimension_numbers = #tpu.dot_dimension_numbers<[1], [0], [0], [1], [0, 0, 1, 1], [], []>} : vector<16x128xbf16>, vector<128x128xbf16>, vector<16x128xf32> -> vector<16x128xf32>
    %18 = vector.extract_strided_slice %0 {offsets = [1, 0], sizes = [1, 128], strides = [1, 1]} : vector<8x256xf32> to vector<1x128xf32>
    %19 = vector.broadcast %18 : vector<1x128xf32> to vector<16x128xf32>
    %20 = arith.addf %17, %19 : vector<16x128xf32>
    %21 = arith.truncf %20 : vector<16x128xf32> to vector<16x128xbf16>
    %c1 = arith.constant 1 : index
    %c0_10 = arith.constant 0 : index
    %c0_11 = arith.constant 0 : index
    %22 = vector.load %arg6[%c1, %c0_10, %c0_11] : memref<3x128x128xbf16, #tpu.memory_space<vmem>>, vector<1x128x128xbf16>
    %23 = vector.shape_cast %22 : vector<1x128x128xbf16> to vector<128x128xbf16>
    %cst_12 = arith.constant dense<0.000000e+00> : vector<16x128xf32>
    %24 = tpu.matmul %21, %23, %cst_12 {dimension_numbers = #tpu.dot_dimension_numbers<[1], [0], [0], [1], [0, 0, 1, 1], [], []>} : vector<16x128xbf16>, vector<128x128xbf16>, vector<16x128xf32> -> vector<16x128xf32>
    %25 = vector.extract_strided_slice %0 {offsets = [2, 0], sizes = [1, 128], strides = [1, 1]} : vector<8x256xf32> to vector<1x128xf32>
    %26 = vector.broadcast %25 : vector<1x128xf32> to vector<16x128xf32>
    %27 = arith.addf %24, %26 : vector<16x128xf32>
    %28 = arith.negf %27 : vector<16x128xf32>
    %29 = math.exp %28 : vector<16x128xf32>
    %cst_13 = arith.constant 1.000000e+00 : f32
    %30 = vector.broadcast %cst_13 : f32 to vector<16x128xf32>
    %31 = arith.addf %30, %29 : vector<16x128xf32>
    %32 = arith.divf %30, %31 : vector<16x128xf32>
    %33 = arith.mulf %27, %32 : vector<16x128xf32>
    %34 = arith.truncf %33 : vector<16x128xf32> to vector<16x128xbf16>
    %c0_14 = arith.constant 0 : index
    %c0_15 = arith.constant 0 : index
    %c0_16 = arith.constant 0 : index
    %35 = vector.load %arg7[%c0_14, %c0_15, %c0_16] : memref<2x128x256xbf16, #tpu.memory_space<vmem>>, vector<1x128x256xbf16>
    %36 = vector.shape_cast %35 : vector<1x128x256xbf16> to vector<128x256xbf16>
    %cst_17 = arith.constant dense<0.000000e+00> : vector<16x256xf32>
    %37 = tpu.matmul %34, %36, %cst_17 {dimension_numbers = #tpu.dot_dimension_numbers<[1], [0], [0], [1], [0, 0, 1, 1], [], []>} : vector<16x128xbf16>, vector<128x256xbf16>, vector<16x256xf32> -> vector<16x256xf32>
    %38 = vector.extract_strided_slice %0 {offsets = [3, 0], sizes = [1, 256], strides = [1, 1]} : vector<8x256xf32> to vector<1x256xf32>
    %39 = vector.broadcast %38 : vector<1x256xf32> to vector<16x256xf32>
    %40 = arith.addf %37, %39 : vector<16x256xf32>
    %c1_18 = arith.constant 1 : index
    %c0_19 = arith.constant 0 : index
    %c0_20 = arith.constant 0 : index
    %41 = vector.load %arg8[%c1_18, %c0_19, %c0_20] : memref<2x128x128xbf16, #tpu.memory_space<vmem>>, vector<1x128x128xbf16>
    %42 = vector.shape_cast %41 : vector<1x128x128xbf16> to vector<128x128xbf16>
    %cst_21 = arith.constant dense<0.000000e+00> : vector<16x128xf32>
    %43 = tpu.matmul %7, %42, %cst_21 {dimension_numbers = #tpu.dot_dimension_numbers<[1], [0], [0], [1], [0, 0, 1, 1], [], []>} : vector<16x128xbf16>, vector<128x128xbf16>, vector<16x128xf32> -> vector<16x128xf32>
    %c0_22 = arith.constant 0 : index
    %c0_23 = arith.constant 0 : index
    %44 = vector.load %arg2[%c0_22, %c0_23] : memref<112x16xf32, #tpu.memory_space<vmem>>, vector<112x16xf32>
    %cst_24 = arith.constant dense<0.000000e+00> : vector<112x256xf32>
    %45 = tpu.matmul %44, %40, %cst_24 {dimension_numbers = #tpu.dot_dimension_numbers<[1], [0], [0], [1], [0, 0, 1, 1], [], []>} : vector<112x16xf32>, vector<16x256xf32>, vector<112x256xf32> -> vector<112x256xf32>
    %cst_25 = arith.constant dense<0.000000e+00> : vector<112x128xf32>
    %46 = tpu.matmul %44, %43, %cst_25 {dimension_numbers = #tpu.dot_dimension_numbers<[1], [0], [0], [1], [0, 0, 1, 1], [], []>} : vector<112x16xf32>, vector<16x128xf32>, vector<112x128xf32> -> vector<112x128xf32>
    %47 = vector.extract_strided_slice %45 {offsets = [0, 0], sizes = [112, 128], strides = [1, 1]} : vector<112x256xf32> to vector<112x128xf32>
    %48 = vector.extract_strided_slice %45 {offsets = [0, 128], sizes = [112, 128], strides = [1, 1]} : vector<112x256xf32> to vector<112x128xf32>
    %cst_26 = arith.constant 5.000000e-01 : f32
    %49 = vector.broadcast %cst_26 : f32 to vector<112x128xf32>
    %50 = arith.mulf %48, %49 : vector<112x128xf32>
    %51 = math.exp %50 : vector<112x128xf32>
    %c0_27 = arith.constant 0 : index
    %c0_28 = arith.constant 0 : index
    %52 = vector.load %arg3[%c0_27, %c0_28] : memref<112x128xf32, #tpu.memory_space<vmem>>, vector<112x128xf32>
    %53 = arith.mulf %51, %52 : vector<112x128xf32>
    %54 = arith.addf %47, %53 : vector<112x128xf32>
    %55 = arith.truncf %54 : vector<112x128xf32> to vector<112x128xbf16>
    %c0_29 = arith.constant 0 : index
    %c0_30 = arith.constant 0 : index
    %c0_31 = arith.constant 0 : index
    %56 = vector.load %arg8[%c0_29, %c0_30, %c0_31] : memref<2x128x128xbf16, #tpu.memory_space<vmem>>, vector<1x128x128xbf16>
    %57 = vector.shape_cast %56 : vector<1x128x128xbf16> to vector<128x128xbf16>
    %cst_32 = arith.constant dense<0.000000e+00> : vector<112x128xf32>
    %58 = tpu.matmul %55, %57, %cst_32 {dimension_numbers = #tpu.dot_dimension_numbers<[1], [0], [0], [1], [0, 0, 1, 1], [], []>} : vector<112x128xbf16>, vector<128x128xbf16>, vector<112x128xf32> -> vector<112x128xf32>
    %59 = arith.addf %58, %46 : vector<112x128xf32>
    %60 = vector.extract_strided_slice %0 {offsets = [4, 0], sizes = [1, 128], strides = [1, 1]} : vector<8x256xf32> to vector<1x128xf32>
    %61 = vector.broadcast %60 : vector<1x128xf32> to vector<112x128xf32>
    %62 = arith.addf %59, %61 : vector<112x128xf32>
    %63 = arith.negf %62 : vector<112x128xf32>
    %64 = math.exp %63 : vector<112x128xf32>
    %cst_33 = arith.constant 1.000000e+00 : f32
    %65 = vector.broadcast %cst_33 : f32 to vector<112x128xf32>
    %66 = arith.addf %65, %64 : vector<112x128xf32>
    %67 = arith.divf %65, %66 : vector<112x128xf32>
    %68 = arith.mulf %62, %67 : vector<112x128xf32>
    %69 = arith.truncf %68 : vector<112x128xf32> to vector<112x128xbf16>
    %c0_34 = arith.constant 0 : index
    %c0_35 = arith.constant 0 : index
    %70 = vector.load %arg9[%c0_34, %c0_35] : memref<128x256xbf16, #tpu.memory_space<vmem>>, vector<128x256xbf16>
    %cst_36 = arith.constant dense<0.000000e+00> : vector<112x256xf32>
    %71 = tpu.matmul %69, %70, %cst_36 {dimension_numbers = #tpu.dot_dimension_numbers<[1], [0], [0], [1], [0, 0, 1, 1], [], []>} : vector<112x128xbf16>, vector<128x256xbf16>, vector<112x256xf32> -> vector<112x256xf32>
    %72 = vector.extract_strided_slice %0 {offsets = [5, 0], sizes = [1, 256], strides = [1, 1]} : vector<8x256xf32> to vector<1x256xf32>
    %73 = vector.broadcast %72 : vector<1x256xf32> to vector<112x256xf32>
    %74 = arith.addf %71, %73 : vector<112x256xf32>
    %75 = vector.extract_strided_slice %74 {offsets = [0, 0], sizes = [112, 128], strides = [1, 1]} : vector<112x256xf32> to vector<112x128xf32>
    %76 = vector.extract_strided_slice %74 {offsets = [0, 128], sizes = [112, 128], strides = [1, 1]} : vector<112x256xf32> to vector<112x128xf32>
    %c2 = arith.constant 2 : index
    %c0_37 = arith.constant 0 : index
    %c0_38 = arith.constant 0 : index
    %77 = vector.load %arg6[%c2, %c0_37, %c0_38] : memref<3x128x128xbf16, #tpu.memory_space<vmem>>, vector<1x128x128xbf16>
    %78 = vector.shape_cast %77 : vector<1x128x128xbf16> to vector<128x128xbf16>
    %cst_39 = arith.constant dense<0.000000e+00> : vector<112x128xf32>
    %79 = tpu.matmul %55, %78, %cst_39 {dimension_numbers = #tpu.dot_dimension_numbers<[1], [0], [0], [1], [0, 0, 1, 1], [], []>} : vector<112x128xbf16>, vector<128x128xbf16>, vector<112x128xf32> -> vector<112x128xf32>
    %80 = vector.extract_strided_slice %0 {offsets = [6, 0], sizes = [1, 128], strides = [1, 1]} : vector<8x256xf32> to vector<1x128xf32>
    %81 = vector.broadcast %80 : vector<1x128xf32> to vector<112x128xf32>
    %82 = arith.addf %79, %81 : vector<112x128xf32>
    %83 = arith.negf %82 : vector<112x128xf32>
    %84 = math.exp %83 : vector<112x128xf32>
    %cst_40 = arith.constant 1.000000e+00 : f32
    %85 = vector.broadcast %cst_40 : f32 to vector<112x128xf32>
    %86 = arith.addf %85, %84 : vector<112x128xf32>
    %87 = arith.divf %85, %86 : vector<112x128xf32>
    %88 = arith.mulf %82, %87 : vector<112x128xf32>
    %89 = arith.truncf %88 : vector<112x128xf32> to vector<112x128xbf16>
    %c1_41 = arith.constant 1 : index
    %c0_42 = arith.constant 0 : index
    %c0_43 = arith.constant 0 : index
    %90 = vector.load %arg7[%c1_41, %c0_42, %c0_43] : memref<2x128x256xbf16, #tpu.memory_space<vmem>>, vector<1x128x256xbf16>
    %91 = vector.shape_cast %90 : vector<1x128x256xbf16> to vector<128x256xbf16>
    %cst_44 = arith.constant dense<0.000000e+00> : vector<112x256xf32>
    %92 = tpu.matmul %89, %91, %cst_44 {dimension_numbers = #tpu.dot_dimension_numbers<[1], [0], [0], [1], [0, 0, 1, 1], [], []>} : vector<112x128xbf16>, vector<128x256xbf16>, vector<112x256xf32> -> vector<112x256xf32>
    %93 = vector.extract_strided_slice %0 {offsets = [7, 0], sizes = [1, 256], strides = [1, 1]} : vector<8x256xf32> to vector<1x256xf32>
    %94 = vector.broadcast %93 : vector<1x256xf32> to vector<112x256xf32>
    %95 = arith.addf %92, %94 : vector<112x256xf32>
    %96 = vector.extract_strided_slice %95 {offsets = [0, 0], sizes = [112, 128], strides = [1, 1]} : vector<112x256xf32> to vector<112x128xf32>
    %97 = vector.extract_strided_slice %95 {offsets = [0, 128], sizes = [112, 128], strides = [1, 1]} : vector<112x256xf32> to vector<112x128xf32>
    %cst_45 = arith.constant 5.000000e-01 : f32
    %98 = vector.broadcast %cst_45 : f32 to vector<112x128xf32>
    %99 = arith.mulf %76, %98 : vector<112x128xf32>
    %100 = math.exp %99 : vector<112x128xf32>
    %c0_46 = arith.constant 0 : index
    %c0_47 = arith.constant 0 : index
    %101 = vector.load %arg4[%c0_46, %c0_47] : memref<112x128xf32, #tpu.memory_space<vmem>>, vector<112x128xf32>
    %102 = arith.mulf %100, %101 : vector<112x128xf32>
    %103 = arith.addf %75, %102 : vector<112x128xf32>
    %c0_48 = arith.constant 0 : index
    %c0_49 = arith.constant 0 : index
    %104 = vector.load %arg11[%c0_48, %c0_49] : memref<112x128xf32, #tpu.memory_space<vmem>>, vector<112x128xf32>
    tpu.vector_store %arg11[%c0_48, %c0_49], %103 {strides = array<i32>} : memref<112x128xf32, #tpu.memory_space<vmem>>, vector<112x128xf32>,
    %105 = vector.extract_strided_slice %47 {offsets = [96, 0], sizes = [16, 128], strides = [1, 1]} : vector<112x128xf32> to vector<16x128xf32>
    %c0_50 = arith.constant 0 : index
    %c0_51 = arith.constant 0 : index
    %106 = vector.load %arg12[%c0_50, %c0_51] : memref<96x128xf32, #tpu.memory_space<vmem>>, vector<16x128xf32>
    tpu.vector_store %arg12[%c0_50, %c0_51], %105 {strides = array<i32>} : memref<96x128xf32, #tpu.memory_space<vmem>>, vector<16x128xf32>,
    %107 = vector.extract_strided_slice %48 {offsets = [96, 0], sizes = [16, 128], strides = [1, 1]} : vector<112x128xf32> to vector<16x128xf32>
    %c16 = arith.constant 16 : index
    %c0_52 = arith.constant 0 : index
    %108 = vector.load %arg12[%c16, %c0_52] : memref<96x128xf32, #tpu.memory_space<vmem>>, vector<16x128xf32>
    tpu.vector_store %arg12[%c16, %c0_52], %107 {strides = array<i32>} : memref<96x128xf32, #tpu.memory_space<vmem>>, vector<16x128xf32>,
    %109 = vector.extract_strided_slice %75 {offsets = [96, 0], sizes = [16, 128], strides = [1, 1]} : vector<112x128xf32> to vector<16x128xf32>
    %c32 = arith.constant 32 : index
    %c0_53 = arith.constant 0 : index
    %110 = vector.load %arg12[%c32, %c0_53] : memref<96x128xf32, #tpu.memory_space<vmem>>, vector<16x128xf32>
    tpu.vector_store %arg12[%c32, %c0_53], %109 {strides = array<i32>} : memref<96x128xf32, #tpu.memory_space<vmem>>, vector<16x128xf32>,
    %111 = vector.extract_strided_slice %76 {offsets = [96, 0], sizes = [16, 128], strides = [1, 1]} : vector<112x128xf32> to vector<16x128xf32>
    %c48 = arith.constant 48 : index
    %c0_54 = arith.constant 0 : index
    %112 = vector.load %arg12[%c48, %c0_54] : memref<96x128xf32, #tpu.memory_space<vmem>>, vector<16x128xf32>
    tpu.vector_store %arg12[%c48, %c0_54], %111 {strides = array<i32>} : memref<96x128xf32, #tpu.memory_space<vmem>>, vector<16x128xf32>,
    %113 = vector.extract_strided_slice %96 {offsets = [96, 0], sizes = [16, 128], strides = [1, 1]} : vector<112x128xf32> to vector<16x128xf32>
    %c64 = arith.constant 64 : index
    %c0_55 = arith.constant 0 : index
    %114 = vector.load %arg12[%c64, %c0_55] : memref<96x128xf32, #tpu.memory_space<vmem>>, vector<16x128xf32>
    tpu.vector_store %arg12[%c64, %c0_55], %113 {strides = array<i32>} : memref<96x128xf32, #tpu.memory_space<vmem>>, vector<16x128xf32>,
    %115 = vector.extract_strided_slice %97 {offsets = [96, 0], sizes = [16, 128], strides = [1, 1]} : vector<112x128xf32> to vector<16x128xf32>
    %c80 = arith.constant 80 : index
    %c0_56 = arith.constant 0 : index
    %116 = vector.load %arg12[%c80, %c0_56] : memref<96x128xf32, #tpu.memory_space<vmem>>, vector<16x128xf32>
    tpu.vector_store %arg12[%c80, %c0_56], %115 {strides = array<i32>} : memref<96x128xf32, #tpu.memory_space<vmem>>, vector<16x128xf32>,
    return
  }
  func.func @transform_0(%arg0: i32) -> (i32, i32) {
    %c0_i32 = arith.constant 0 : i32
    %c0_i32_0 = arith.constant 0 : i32
    %c0_i32_1 = arith.constant 0 : i32
    return %c0_i32, %c0_i32_0 : i32, i32
  }
  func.func @transform_1(%arg0: i32) -> (i32, i32) {
    %c0_i32 = arith.constant 0 : i32
    %c0_i32_0 = arith.constant 0 : i32
    %c0_i32_1 = arith.constant 0 : i32
    return %c0_i32, %c0_i32_0 : i32, i32
  }
  func.func @transform_2(%arg0: i32) -> (i32, i32) {
    %c0_i32 = arith.constant 0 : i32
    %c0_i32_0 = arith.constant 0 : i32
    %c0_i32_1 = arith.constant 0 : i32
    return %c0_i32, %c0_i32_0 : i32, i32
  }
  func.func @transform_3(%arg0: i32) -> (i32, i32) {
    %c0_i32 = arith.constant 0 : i32
    %c0_i32_0 = arith.constant 0 : i32
    %c0_i32_1 = arith.constant 0 : i32
    return %c0_i32, %c0_i32_0 : i32, i32
  }
  func.func @transform_4(%arg0: i32) -> (i32, i32) {
    %c0_i32 = arith.constant 0 : i32
    %c0_i32_0 = arith.constant 0 : i32
    %c0_i32_1 = arith.constant 0 : i32
    return %c0_i32, %c0_i32_0 : i32, i32
  }
  func.func @transform_5(%arg0: i32) -> (i32, i32, i32) {
    %c0_i32 = arith.constant 0 : i32
    %c0_i32_0 = arith.constant 0 : i32
    %c0_i32_1 = arith.constant 0 : i32
    %c0_i32_2 = arith.constant 0 : i32
    return %c0_i32, %c0_i32_0, %c0_i32_1 : i32, i32, i32
  }
  func.func @transform_6(%arg0: i32) -> (i32, i32, i32) {
    %c0_i32 = arith.constant 0 : i32
    %c0_i32_0 = arith.constant 0 : i32
    %c0_i32_1 = arith.constant 0 : i32
    %c0_i32_2 = arith.constant 0 : i32
    return %c0_i32, %c0_i32_0, %c0_i32_1 : i32, i32, i32
  }
  func.func @transform_7(%arg0: i32) -> (i32, i32, i32) {
    %c0_i32 = arith.constant 0 : i32
    %c0_i32_0 = arith.constant 0 : i32
    %c0_i32_1 = arith.constant 0 : i32
    %c0_i32_2 = arith.constant 0 : i32
    return %c0_i32, %c0_i32_0, %c0_i32_1 : i32, i32, i32
  }
  func.func @transform_8(%arg0: i32) -> (i32, i32) {
    %c0_i32 = arith.constant 0 : i32
    %c0_i32_0 = arith.constant 0 : i32
    %c0_i32_1 = arith.constant 0 : i32
    return %c0_i32, %c0_i32_0 : i32, i32
  }
  func.func @transform_9(%arg0: i32) -> (i32, i32) {
    %c0_i32 = arith.constant 0 : i32
    %c0_i32_0 = arith.constant 0 : i32
    %c0_i32_1 = arith.constant 0 : i32
    return %c0_i32, %c0_i32_0 : i32, i32
  }
  func.func @transform_10(%arg0: i32) -> (i32, i32) {
    %c0_i32 = arith.constant 0 : i32
    %c0_i32_0 = arith.constant 0 : i32
    %c0_i32_1 = arith.constant 0 : i32
    return %c0_i32, %c0_i32_0 : i32, i32
  }
  func.func @transform_11(%arg0: i32) -> (i32, i32) {
    %c0_i32 = arith.constant 0 : i32
    %c0_i32_0 = arith.constant 0 : i32
    %c0_i32_1 = arith.constant 0 : i32
    return %c0_i32, %c0_i32_0 : i32, i32
  }
}

</mosaic_0001>

<llo_original>
// kernel: vfsddpm_forward.1
$region0: #{vfsddpm_forward.1}
  #allocation0 [shape = 'u32[]', space=smem, size = 0x4, offset = 0x4, fixed_abs, tag = 'smem constant byte address 0x4 - core index']
  #allocation1 [shape = 'u32[144,128]{1,0:T(1,128)}', space=vmem, size = 0x12000, scoped, tag = 'internal scratch']
  %s0 = inlined_call_operand.vmem [shape: bf16[16,128], index: 0, kind: input, shape index: {}]
  %s1 = inlined_call_operand.vmem [shape: f32[112,16], index: 1, kind: input, shape index: {}]
  %s2 = inlined_call_operand.vmem [shape: f32[112,128], index: 2, kind: input, shape index: {}]
  %s3 = inlined_call_operand.vmem [shape: f32[112,128], index: 3, kind: input, shape index: {}]
  %s4 = inlined_call_operand.vmem [shape: bf16[128,128], index: 4, kind: input, shape index: {}]
  %s5 = inlined_call_operand.vmem [shape: bf16[3,128,128], index: 5, kind: input, shape index: {}]
  %s6 = inlined_call_operand.vmem [shape: bf16[2,128,256], index: 6, kind: input, shape index: {}]
  %s7 = inlined_call_operand.vmem [shape: bf16[2,128,128], index: 7, kind: input, shape index: {}]
  %s8 = inlined_call_operand.vmem [shape: bf16[128,256], index: 8, kind: input, shape index: {}]
  %s9 = inlined_call_operand.vmem [shape: f32[8,256], index: 9, kind: input, shape index: {}]
  %s10 = inlined_call_operand.vmem [shape: f32[112,128], index: 10, kind: output, shape index: {0}]
  %s11 = inlined_call_operand.vmem [shape: f32[96,128], index: 11, kind: output, shape index: {1}]
  %12 = xla_tuple %s10, %s11
  %s13 = sld [smem:[#allocation0]]
  $region58: #{vfsddpm_forward.1} parent=0
    _
  %s15 = ssub.s32 1, %s13
  %s16 = scalar_select 0, %s15, %s13
  // Predicated region
  $region2: #{vfsddpm_forward.1} parent=0 // pred_check
    _
  $region3: #{vfsddpm_forward.1} parent=0 // pred_check_branch
    %18 = sbr.rel (0) target = $region5
  $region4: #{vfsddpm_forward.1} parent=0 // pred_region
    _
  $region5: #{vfsddpm_forward.1} parent=0 // pred_fallthru
    _
  // Predicated region
  $region6: #{vfsddpm_forward.1} parent=0 // pred_check
    _
  $region7: #{vfsddpm_forward.1} parent=0 // pred_check_branch
    %20 = sbr.rel (0) target = $region9
  $region8: #{vfsddpm_forward.1} parent=0 // pred_region
    _
  $region9: #{vfsddpm_forward.1} parent=0 // pred_fallthru
    _
  // Predicated region
  $region10: #{vfsddpm_forward.1} parent=0 // pred_check
    _
  $region11: #{vfsddpm_forward.1} parent=0 // pred_check_branch
    %22 = sbr.rel (0) target = $region13
  $region12: #{vfsddpm_forward.1} parent=0 // pred_region
    _
  $region13: #{vfsddpm_forward.1} parent=0 // pred_fallthru
    _
  // Predicated region
  $region14: #{vfsddpm_forward.1} parent=0 // pred_check
    _
  $region15: #{vfsddpm_forward.1} parent=0 // pred_check_branch
    %24 = sbr.rel (0) target = $region17
  $region16: #{vfsddpm_forward.1} parent=0 // pred_region
    _
  $region17: #{vfsddpm_forward.1} parent=0 // pred_fallthru
    _
  // Predicated region
  $region18: #{vfsddpm_forward.1} parent=0 // pred_check
    _
  $region19: #{vfsddpm_forward.1} parent=0 // pred_check_branch
    %26 = sbr.rel (0) target = $region21
  $region20: #{vfsddpm_forward.1} parent=0 // pred_region
    _
  $region21: #{vfsddpm_forward.1} parent=0 // pred_fallthru
    _
  // Predicated region
  $region22: #{vfsddpm_forward.1} parent=0 // pred_check
    _
  $region23: #{vfsddpm_forward.1} parent=0 // pred_check_branch
    %28 = sbr.rel (0) target = $region25
  $region24: #{vfsddpm_forward.1} parent=0 // pred_region
    _
  $region25: #{vfsddpm_forward.1} parent=0 // pred_fallthru
    _
  // Predicated region
  $region26: #{vfsddpm_forward.1} parent=0 // pred_check
    _
  $region27: #{vfsddpm_forward.1} parent=0 // pred_check_branch
    %30 = sbr.rel (0) target = $region29
  $region28: #{vfsddpm_forward.1} parent=0 // pred_region
    _
  $region29: #{vfsddpm_forward.1} parent=0 // pred_fallthru
    _
  // Predicated region
  $region30: #{vfsddpm_forward.1} parent=0 // pred_check
    _
  $region31: #{vfsddpm_forward.1} parent=0 // pred_check_branch
    %32 = sbr.rel (0) target = $region33
  $region32: #{vfsddpm_forward.1} parent=0 // pred_region
    _
  $region33: #{vfsddpm_forward.1} parent=0 // pred_fallthru
    _
  // Predicated region
  $region34: #{vfsddpm_forward.1} parent=0 // pred_check
    _
  $region35: #{vfsddpm_forward.1} parent=0 // pred_check_branch
    %34 = sbr.rel (0) target = $region37
  $region36: #{vfsddpm_forward.1} parent=0 // pred_region
    _
  $region37: #{vfsddpm_forward.1} parent=0 // pred_fallthru
    _
  // Predicated region
  $region38: #{vfsddpm_forward.1} parent=0 // pred_check
    _
  $region39: #{vfsddpm_forward.1} parent=0 // pred_check_branch
    %36 = sbr.rel (0) target = $region41
  $region40: #{vfsddpm_forward.1} parent=0 // pred_region
    _
  $region41: #{vfsddpm_forward.1} parent=0 // pred_fallthru
    _
  %v38 = vld [vmem:[%s9] sm:$0xff]
  %v39 = vld [vmem:[%s9 + $0x8] sm:$0xff]
  %v40 = vld [vmem:[%s0] sm:$0xf]
  %v41 = vld [vmem:[%s0 + $0x4] sm:$0xf]
  %v42 = vld [vmem:[%s4] sm:$0xf]
  %v43 = vld [vmem:[%s4 + $0x4] sm:$0xf]
  %v44 = vld [vmem:[%s4 + $0x8] sm:$0xf]
  %v45 = vld [vmem:[%s4 + $0xc] sm:$0xf]
  %v46 = vld [vmem:[%s4 + $0x10] sm:$0xf]
  %v47 = vld [vmem:[%s4 + $0x14] sm:$0xf]
  %v48 = vld [vmem:[%s4 + $0x18] sm:$0xf]
  %v49 = vld [vmem:[%s4 + $0x1c] sm:$0xf]
  %v50 = vld [vmem:[%s4 + $0x20] sm:$0xf]
  %v51 = vld [vmem:[%s4 + $0x24] sm:$0xf]
  %v52 = vld [vmem:[%s4 + $0x28] sm:$0xf]
  %v53 = vld [vmem:[%s4 + $0x2c] sm:$0xf]
  %v54 = vld [vmem:[%s4 + $0x30] sm:$0xf]
  %v55 = vld [vmem:[%s4 + $0x34] sm:$0xf]
  %v56 = vld [vmem:[%s4 + $0x38] sm:$0xf]
  %v57 = vld [vmem:[%s4 + $0x3c] sm:$0xf]
  %v58 = vlaneseq
  %v59 = vshrl.u32 %v58, 7
  %v60 = vsub.s32 0, %v59
  %v61 = vrot.slane %v38, %v60
  %v64 = vunpack.c.l.b16 %v40
  %v65 = vunpack.c.l.b16 %v41
  %v66 = vpack.c.b16 %v65, %v64
  %v84 = vunpack.c.l.b16 %v42
  %v85 = vunpack.c.l.b16 %v43
  %v86 = vunpack.c.l.b16 %v44
  %v87 = vunpack.c.l.b16 %v45
  %v88 = vunpack.c.l.b16 %v46
  %v89 = vunpack.c.l.b16 %v47
  %v90 = vunpack.c.l.b16 %v48
  %v91 = vunpack.c.l.b16 %v49
  %v92 = vunpack.c.l.b16 %v50
  %v93 = vunpack.c.l.b16 %v51
  %v94 = vunpack.c.l.b16 %v52
  %v95 = vunpack.c.l.b16 %v53
  %v96 = vunpack.c.l.b16 %v54
  %v97 = vunpack.c.l.b16 %v55
  %v98 = vunpack.c.l.b16 %v56
  %v99 = vunpack.c.l.b16 %v57
  %v100 = vpack.c.b16 %v85, %v84
  %v101 = vpack.c.b16 %v87, %v86
  %v102 = vpack.c.b16 %v89, %v88
  %v103 = vpack.c.b16 %v91, %v90
  %v104 = vpack.c.b16 %v93, %v92
  %v105 = vpack.c.b16 %v95, %v94
  %v106 = vpack.c.b16 %v97, %v96
  %v107 = vpack.c.b16 %v99, %v98
  %116 = vmatprep.subr.bf16.mxu0 0
  %117 = vmatpush1.bf16.msra.mxu0 %v100
  %118 = vmatprep.subr.bf16.mxu0 0
  %119 = vmatpush1.bf16.msra.mxu0 %v101
  %120 = vmatprep.subr.bf16.mxu0 0
  %121 = vmatpush1.bf16.msra.mxu0 %v102
  %122 = vmatprep.subr.bf16.mxu0 0
  %123 = vmatpush1.bf16.msra.mxu0 %v103
  %124 = vmatprep.subr.bf16.mxu0 0
  %125 = vmatpush1.bf16.msra.mxu0 %v104
  %126 = vmatprep.subr.bf16.mxu0 0
  %127 = vmatpush1.bf16.msra.mxu0 %v105
  %128 = vmatprep.subr.bf16.mxu0 0
  %129 = vmatpush1.bf16.msra.mxu0 %v106
  %130 = vmatprep.subr.bf16.mxu0 0
  %131 = vmatpush1.bf16.msra.mxu0 %v107
  %132 = vmatprep.subr.bf16.mxu0 0
  %133 = vmatpush1.bf16.msra.mxu0 0
  %134 = vmatprep.subr.bf16.mxu0 0
  %135 = vmatpush1.bf16.msra.mxu0 0
  %136 = vmatprep.subr.bf16.mxu0 0
  %137 = vmatpush1.bf16.msra.mxu0 0
  %138 = vmatprep.subr.bf16.mxu0 0
  %139 = vmatpush1.bf16.msra.mxu0 0
  %140 = vmatprep.subr.bf16.mxu0 0
  %141 = vmatpush1.bf16.msra.mxu0 0
  %142 = vmatprep.subr.bf16.mxu0 0
  %143 = vmatpush1.bf16.msra.mxu0 0
  %144 = vmatprep.subr.bf16.mxu0 0
  %145 = vmatpush1.bf16.msra.mxu0 0
  %146 = vmatprep.subr.bf16.mxu0 0
  %147 = vmatpush1.bf16.msra.mxu0 0
  %148 = vmatprep.mubr.bf16.mxu0 0
  %149 = vmatmul.mubr.bf16.gmra.mrb[0].mxu0 %v66
  %v150 = vpop.f32.mrb[0].mxu0
  %v151 = vadd.f32 %v61, %v150
  %v152 = vpop.f32.mrb[0].mxu0
  %v153 = vpop.f32.mrb[0].mxu0
  %v154 = vadd.f32 %v61, %v153
  %v155 = vpop.f32.mrb[0].mxu0
  %156 = vdwg.mxu0
  %v157 = vpack.c.bf16 %v154, %v151
  %v158 = vxor.u32 %v151, 2147483648
  %v159 = vxor.u32 %v154, 2147483648
  %v160 = vmul.f32 %v158, 1.442695
  %v161 = vpow.pop %v160
  %v162 = vmul.f32 %v159, 1.442695
  %v163 = vpow.pop %v162
  %v164 = vadd.f32 %v161, 1.0
  %v165 = vadd.f32 %v163, 1.0
  %v166 = vrcp.pop %v164
  %v167 = vmul.f32 1.0, %v166
  %v168 = vrcp.pop %v165
  %v169 = vmul.f32 1.0, %v168
  %v170 = vmul.f32 %v151, %v167
  %v171 = vmul.f32 %v154, %v169
  %v172 = vpack.c.bf16 %v171, %v170
  %v173 = vld [vmem:[%s5] sm:$0xf]
  %v174 = vld [vmem:[%s5 + $0x4] sm:$0xf]
  %v175 = vld [vmem:[%s5 + $0x8] sm:$0xf]
  %v176 = vld [vmem:[%s5 + $0xc] sm:$0xf]
  %v177 = vld [vmem:[%s5 + $0x10] sm:$0xf]
  %v178 = vld [vmem:[%s5 + $0x14] sm:$0xf]
  %v179 = vld [vmem:[%s5 + $0x18] sm:$0xf]
  %v180 = vld [vmem:[%s5 + $0x1c] sm:$0xf]
  %v181 = vld [vmem:[%s5 + $0x20] sm:$0xf]
  %v182 = vld [vmem:[%s5 + $0x24] sm:$0xf]
  %v183 = vld [vmem:[%s5 + $0x28] sm:$0xf]
  %v184 = vld [vmem:[%s5 + $0x2c] sm:$0xf]
  %v185 = vld [vmem:[%s5 + $0x30] sm:$0xf]
  %v186 = vld [vmem:[%s5 + $0x34] sm:$0xf]
  %v187 = vld [vmem:[%s5 + $0x38] sm:$0xf]
  %v188 = vld [vmem:[%s5 + $0x3c] sm:$0xf]
  %v189 = vlaneseq
  %v190 = vshrl.u32 %v189, 7
  %v191 = vsub.s32 1, %v190
  %v192 = vrot.slane %v38, %v191
  %v209 = vunpack.c.l.b16 %v173
  %v210 = vunpack.c.l.b16 %v174
  %v211 = vunpack.c.l.b16 %v175
  %v212 = vunpack.c.l.b16 %v176
  %v213 = vunpack.c.l.b16 %v177
  %v214 = vunpack.c.l.b16 %v178
  %v215 = vunpack.c.l.b16 %v179
  %v216 = vunpack.c.l.b16 %v180
  %v217 = vunpack.c.l.b16 %v181
  %v218 = vunpack.c.l.b16 %v182
  %v219 = vunpack.c.l.b16 %v183
  %v220 = vunpack.c.l.b16 %v184
  %v221 = vunpack.c.l.b16 %v185
  %v222 = vunpack.c.l.b16 %v186
  %v223 = vunpack.c.l.b16 %v187
  %v224 = vunpack.c.l.b16 %v188
  %v225 = vpack.c.b16 %v210, %v209
  %v226 = vpack.c.b16 %v212, %v211
  %v227 = vpack.c.b16 %v214, %v213
  %v228 = vpack.c.b16 %v216, %v215
  %v229 = vpack.c.b16 %v218, %v217
  %v230 = vpack.c.b16 %v220, %v219
  %v231 = vpack.c.b16 %v222, %v221
  %v232 = vpack.c.b16 %v224, %v223
  %241 = vmatprep.subr.bf16.mxu0 0
  %242 = vmatpush1.bf16.msra.mxu0 %v225
  %243 = vmatprep.subr.bf16.mxu0 0
  %244 = vmatpush1.bf16.msra.mxu0 %v226
  %245 = vmatprep.subr.bf16.mxu0 0
  %246 = vmatpush1.bf16.msra.mxu0 %v227
  %247 = vmatprep.subr.bf16.mxu0 0
  %248 = vmatpush1.bf16.msra.mxu0 %v228
  %249 = vmatprep.subr.bf16.mxu0 0
  %250 = vmatpush1.bf16.msra.mxu0 %v229
  %251 = vmatprep.subr.bf16.mxu0 0
  %252 = vmatpush1.bf16.msra.mxu0 %v230
  %253 = vmatprep.subr.bf16.mxu0 0
  %254 = vmatpush1.bf16.msra.mxu0 %v231
  %255 = vmatprep.subr.bf16.mxu0 0
  %256 = vmatpush1.bf16.msra.mxu0 %v232
  %257 = vmatprep.subr.bf16.mxu0 0
  %258 = vmatpush1.bf16.msra.mxu0 0
  %259 = vmatprep.subr.bf16.mxu0 0
  %260 = vmatpush1.bf16.msra.mxu0 0
  %261 = vmatprep.subr.bf16.mxu0 0
  %262 = vmatpush1.bf16.msra.mxu0 0
  %263 = vmatprep.subr.bf16.mxu0 0
  %264 = vmatpush1.bf16.msra.mxu0 0
  %265 = vmatprep.subr.bf16.mxu0 0
  %266 = vmatpush1.bf16.msra.mxu0 0
  %267 = vmatprep.subr.bf16.mxu0 0
  %268 = vmatpush1.bf16.msra.mxu0 0
  %269 = vmatprep.subr.bf16.mxu0 0
  %270 = vmatpush1.bf16.msra.mxu0 0
  %271 = vmatprep.subr.bf16.mxu0 0
  %272 = vmatpush1.bf16.msra.mxu0 0
  %273 = vmatprep.mubr.bf16.mxu0 0
  %274 = vmatmul.mubr.bf16.gmra.mrb[0].mxu0 %v172
  %v275 = vpop.f32.mrb[0].mxu0
  %v276 = vadd.f32 %v192, %v275
  %v277 = vpop.f32.mrb[0].mxu0
  %v278 = vpop.f32.mrb[0].mxu0
  %v279 = vadd.f32 %v192, %v278
  %v280 = vpop.f32.mrb[0].mxu0
  %281 = vdwg.mxu0
  %v282 = vpack.c.bf16 %v279, %v276
  %s283 = scalar_lea.vmem %s5, 64
  %v284 = vld [vmem:[%s283] sm:$0xf]
  %v285 = vld [vmem:[%s283 + $0x4] sm:$0xf]
  %v286 = vld [vmem:[%s283 + $0x8] sm:$0xf]
  %v287 = vld [vmem:[%s283 + $0xc] sm:$0xf]
  %v288 = vld [vmem:[%s283 + $0x10] sm:$0xf]
  %v289 = vld [vmem:[%s283 + $0x14] sm:$0xf]
  %v290 = vld [vmem:[%s283 + $0x18] sm:$0xf]
  %v291 = vld [vmem:[%s283 + $0x1c] sm:$0xf]
  %v292 = vld [vmem:[%s283 + $0x20] sm:$0xf]
  %v293 = vld [vmem:[%s283 + $0x24] sm:$0xf]
  %v294 = vld [vmem:[%s283 + $0x28] sm:$0xf]
  %v295 = vld [vmem:[%s283 + $0x2c] sm:$0xf]
  %v296 = vld [vmem:[%s283 + $0x30] sm:$0xf]
  %v297 = vld [vmem:[%s283 + $0x34] sm:$0xf]
  %v298 = vld [vmem:[%s283 + $0x38] sm:$0xf]
  %v299 = vld [vmem:[%s283 + $0x3c] sm:$0xf]
  %v300 = vlaneseq
  %v301 = vshrl.u32 %v300, 7
  %v302 = vsub.s32 2, %v301
  %v303 = vrot.slane %v38, %v302
  %v320 = vunpack.c.l.b16 %v284
  %v321 = vunpack.c.l.b16 %v285
  %v322 = vunpack.c.l.b16 %v286
  %v323 = vunpack.c.l.b16 %v287
  %v324 = vunpack.c.l.b16 %v288
  %v325 = vunpack.c.l.b16 %v289
  %v326 = vunpack.c.l.b16 %v290
  %v327 = vunpack.c.l.b16 %v291
  %v328 = vunpack.c.l.b16 %v292
  %v329 = vunpack.c.l.b16 %v293
  %v330 = vunpack.c.l.b16 %v294
  %v331 = vunpack.c.l.b16 %v295
  %v332 = vunpack.c.l.b16 %v296
  %v333 = vunpack.c.l.b16 %v297
  %v334 = vunpack.c.l.b16 %v298
  %v335 = vunpack.c.l.b16 %v299
  %v336 = vpack.c.b16 %v321, %v320
  %v337 = vpack.c.b16 %v323, %v322
  %v338 = vpack.c.b16 %v325, %v324
  %v339 = vpack.c.b16 %v327, %v326
  %v340 = vpack.c.b16 %v329, %v328
  %v341 = vpack.c.b16 %v331, %v330
  %v342 = vpack.c.b16 %v333, %v332
  %v343 = vpack.c.b16 %v335, %v334
  %352 = vmatprep.subr.bf16.mxu0 0
  %353 = vmatpush1.bf16.msra.mxu0 %v336
  %354 = vmatprep.subr.bf16.mxu0 0
  %355 = vmatpush1.bf16.msra.mxu0 %v337
  %356 = vmatprep.subr.bf16.mxu0 0
  %357 = vmatpush1.bf16.msra.mxu0 %v338
  %358 = vmatprep.subr.bf16.mxu0 0
  %359 = vmatpush1.bf16.msra.mxu0 %v339
  %360 = vmatprep.subr.bf16.mxu0 0
  %361 = vmatpush1.bf16.msra.mxu0 %v340
  %362 = vmatprep.subr.bf16.mxu0 0
  %363 = vmatpush1.bf16.msra.mxu0 %v341
  %364 = vmatprep.subr.bf16.mxu0 0
  %365 = vmatpush1.bf16.msra.mxu0 %v342
  %366 = vmatprep.subr.bf16.mxu0 0
  %367 = vmatpush1.bf16.msra.mxu0 %v343
  %368 = vmatprep.subr.bf16.mxu0 0
  %369 = vmatpush1.bf16.msra.mxu0 0
  %370 = vmatprep.subr.bf16.mxu0 0
  %371 = vmatpush1.bf16.msra.mxu0 0
  %372 = vmatprep.subr.bf16.mxu0 0
  %373 = vmatpush1.bf16.msra.mxu0 0
  %374 = vmatprep.subr.bf16.mxu0 0
  %375 = vmatpush1.bf16.msra.mxu0 0
  %376 = vmatprep.subr.bf16.mxu0 0
  %377 = vmatpush1.bf16.msra.mxu0 0
  %378 = vmatprep.subr.bf16.mxu0 0
  %379 = vmatpush1.bf16.msra.mxu0 0
  %380 = vmatprep.subr.bf16.mxu0 0
  %381 = vmatpush1.bf16.msra.mxu0 0
  %382 = vmatprep.subr.bf16.mxu0 0
  %383 = vmatpush1.bf16.msra.mxu0 0
  %384 = vmatprep.mubr.bf16.mxu0 0
  %385 = vmatmul.mubr.bf16.gmra.mrb[0].mxu0 %v282
  %v386 = vpop.f32.mrb[0].mxu0
  %v387 = vadd.f32 %v303, %v386
  %v388 = vpop.f32.mrb[0].mxu0
  %v389 = vpop.f32.mrb[0].mxu0
  %v390 = vadd.f32 %v303, %v389
  %v391 = vpop.f32.mrb[0].mxu0
  %392 = vdwg.mxu0
  %v393 = vxor.u32 %v387, 2147483648
  %v394 = vxor.u32 %v390, 2147483648
  %v395 = vmul.f32 %v393, 1.442695
  %v396 = vpow.pop %v395
  %v397 = vmul.f32 %v394, 1.442695
  %v398 = vpow.pop %v397
  %v399 = vadd.f32 %v396, 1.0
  %v400 = vadd.f32 %v398, 1.0
  %v401 = vrcp.pop %v399
  %v402 = vmul.f32 1.0, %v401
  %v403 = vrcp.pop %v400
  %v404 = vmul.f32 1.0, %v403
  %v405 = vmul.f32 %v387, %v402
  %v406 = vmul.f32 %v390, %v404
  %v407 = vpack.c.bf16 %v406, %v405
  %v408 = vld [vmem:[%s6] sm:$0xff]
  %v409 = vld [vmem:[%s6 + $0x8] sm:$0xff]
  %v410 = vld [vmem:[%s6 + $0x10] sm:$0xff]
  %v411 = vld [vmem:[%s6 + $0x18] sm:$0xff]
  %v412 = vld [vmem:[%s6 + $0x20] sm:$0xff]
  %v413 = vld [vmem:[%s6 + $0x28] sm:$0xff]
  %v414 = vld [vmem:[%s6 + $0x30] sm:$0xff]
  %v415 = vld [vmem:[%s6 + $0x38] sm:$0xff]
  %v416 = vld [vmem:[%s6 + $0x40] sm:$0xff]
  %v417 = vld [vmem:[%s6 + $0x48] sm:$0xff]
  %v418 = vld [vmem:[%s6 + $0x50] sm:$0xff]
  %v419 = vld [vmem:[%s6 + $0x58] sm:$0xff]
  %v420 = vld [vmem:[%s6 + $0x60] sm:$0xff]
  %v421 = vld [vmem:[%s6 + $0x68] sm:$0xff]
  %v422 = vld [vmem:[%s6 + $0x70] sm:$0xff]
  %v423 = vld [vmem:[%s6 + $0x78] sm:$0xff]
  %v424 = vlaneseq
  %v425 = vshrl.u32 %v424, 7
  %v426 = vsub.s32 3, %v425
  %v427 = vrot.slane %v38, %v426
  %v428 = vlaneseq
  %v429 = vshrl.u32 %v428, 7
  %v430 = vsub.s32 3, %v429
  %v431 = vrot.slane %v39, %v430
  %v448 = vunpack.c.l.b16 %v408
  %v449 = vunpack.c.h.b16 %v408
  %v450 = vunpack.c.l.b16 %v409
  %v451 = vunpack.c.h.b16 %v409
  %v452 = vunpack.c.l.b16 %v410
  %v453 = vunpack.c.h.b16 %v410
  %v454 = vunpack.c.l.b16 %v411
  %v455 = vunpack.c.h.b16 %v411
  %v456 = vunpack.c.l.b16 %v412
  %v457 = vunpack.c.h.b16 %v412
  %v458 = vunpack.c.l.b16 %v413
  %v459 = vunpack.c.h.b16 %v413
  %v460 = vunpack.c.l.b16 %v414
  %v461 = vunpack.c.h.b16 %v414
  %v462 = vunpack.c.l.b16 %v415
  %v463 = vunpack.c.h.b16 %v415
  %v464 = vunpack.c.l.b16 %v416
  %v465 = vunpack.c.h.b16 %v416
  %v466 = vunpack.c.l.b16 %v417
  %v467 = vunpack.c.h.b16 %v417
  %v468 = vunpack.c.l.b16 %v418
  %v469 = vunpack.c.h.b16 %v418
  %v470 = vunpack.c.l.b16 %v419
  %v471 = vunpack.c.h.b16 %v419
  %v472 = vunpack.c.l.b16 %v420
  %v473 = vunpack.c.h.b16 %v420
  %v474 = vunpack.c.l.b16 %v421
  %v475 = vunpack.c.h.b16 %v421
  %v476 = vunpack.c.l.b16 %v422
  %v477 = vunpack.c.h.b16 %v422
  %v478 = vunpack.c.l.b16 %v423
  %v479 = vunpack.c.h.b16 %v423
  %v480 = vpack.c.b16 %v450, %v448
  %v481 = vpack.c.b16 %v451, %v449
  %v482 = vpack.c.b16 %v454, %v452
  %v483 = vpack.c.b16 %v455, %v453
  %v484 = vpack.c.b16 %v458, %v456
  %v485 = vpack.c.b16 %v459, %v457
  %v486 = vpack.c.b16 %v462, %v460
  %v487 = vpack.c.b16 %v463, %v461
  %v488 = vpack.c.b16 %v466, %v464
  %v489 = vpack.c.b16 %v467, %v465
  %v490 = vpack.c.b16 %v470, %v468
  %v491 = vpack.c.b16 %v471, %v469
  %v492 = vpack.c.b16 %v474, %v472
  %v493 = vpack.c.b16 %v475, %v473
  %v494 = vpack.c.b16 %v478, %v476
  %v495 = vpack.c.b16 %v479, %v477
  %512 = vmatprep.subr.bf16.mxu0 %v481
  %513 = vmatpush1.bf16.msra.mxu0 %v480
  %514 = vmatprep.subr.bf16.mxu0 %v483
  %515 = vmatpush1.bf16.msra.mxu0 %v482
  %516 = vmatprep.subr.bf16.mxu0 %v485
  %517 = vmatpush1.bf16.msra.mxu0 %v484
  %518 = vmatprep.subr.bf16.mxu0 %v487
  %519 = vmatpush1.bf16.msra.mxu0 %v486
  %520 = vmatprep.subr.bf16.mxu0 %v489
  %521 = vmatpush1.bf16.msra.mxu0 %v488
  %522 = vmatprep.subr.bf16.mxu0 %v491
  %523 = vmatpush1.bf16.msra.mxu0 %v490
  %524 = vmatprep.subr.bf16.mxu0 %v493
  %525 = vmatpush1.bf16.msra.mxu0 %v492
  %526 = vmatprep.subr.bf16.mxu0 %v495
  %527 = vmatpush1.bf16.msra.mxu0 %v494
  %528 = vmatprep.subr.bf16.mxu0 0
  %529 = vmatpush1.bf16.msra.mxu0 0
  %530 = vmatprep.subr.bf16.mxu0 0
  %531 = vmatpush1.bf16.msra.mxu0 0
  %532 = vmatprep.subr.bf16.mxu0 0
  %533 = vmatpush1.bf16.msra.mxu0 0
  %534 = vmatprep.subr.bf16.mxu0 0
  %535 = vmatpush1.bf16.msra.mxu0 0
  %536 = vmatprep.subr.bf16.mxu0 0
  %537 = vmatpush1.bf16.msra.mxu0 0
  %538 = vmatprep.subr.bf16.mxu0 0
  %539 = vmatpush1.bf16.msra.mxu0 0
  %540 = vmatprep.subr.bf16.mxu0 0
  %541 = vmatpush1.bf16.msra.mxu0 0
  %542 = vmatprep.subr.bf16.mxu0 0
  %543 = vmatpush1.bf16.msra.mxu0 0
  %544 = vmatprep.mubr.bf16.mxu0 0
  %545 = vmatmul.mubr.bf16.gmra.mrb[0].mxu0 %v407
  %v546 = vpop.f32.mrb[0].mxu0
  %v547 = vadd.f32 %v427, %v546
  %v548 = vpop.f32.mrb[0].mxu0
  %v549 = vadd.f32 %v431, %v548
  %v550 = vpop.f32.mrb[0].mxu0
  %v551 = vadd.f32 %v427, %v550
  %v552 = vpop.f32.mrb[0].mxu0
  %v553 = vadd.f32 %v431, %v552
  %554 = vdwg.mxu0
  %s555 = scalar_lea.vmem %s7, 64
  %v556 = vld [vmem:[%s555] sm:$0xf]
  %v557 = vld [vmem:[%s555 + $0x4] sm:$0xf]
  %v558 = vld [vmem:[%s555 + $0x8] sm:$0xf]
  %v559 = vld [vmem:[%s555 + $0xc] sm:$0xf]
  %v560 = vld [vmem:[%s555 + $0x10] sm:$0xf]
  %v561 = vld [vmem:[%s555 + $0x14] sm:$0xf]
  %v562 = vld [vmem:[%s555 + $0x18] sm:$0xf]
  %v563 = vld [vmem:[%s555 + $0x1c] sm:$0xf]
  %v564 = vld [vmem:[%s555 + $0x20] sm:$0xf]
  %v565 = vld [vmem:[%s555 + $0x24] sm:$0xf]
  %v566 = vld [vmem:[%s555 + $0x28] sm:$0xf]
  %v567 = vld [vmem:[%s555 + $0x2c] sm:$0xf]
  %v568 = vld [vmem:[%s555 + $0x30] sm:$0xf]
  %v569 = vld [vmem:[%s555 + $0x34] sm:$0xf]
  %v570 = vld [vmem:[%s555 + $0x38] sm:$0xf]
  %v571 = vld [vmem:[%s555 + $0x3c] sm:$0xf]
  %v588 = vunpack.c.l.b16 %v556
  %v589 = vunpack.c.l.b16 %v557
  %v590 = vunpack.c.l.b16 %v558
  %v591 = vunpack.c.l.b16 %v559
  %v592 = vunpack.c.l.b16 %v560
  %v593 = vunpack.c.l.b16 %v561
  %v594 = vunpack.c.l.b16 %v562
  %v595 = vunpack.c.l.b16 %v563
  %v596 = vunpack.c.l.b16 %v564
  %v597 = vunpack.c.l.b16 %v565
  %v598 = vunpack.c.l.b16 %v566
  %v599 = vunpack.c.l.b16 %v567
  %v600 = vunpack.c.l.b16 %v568
  %v601 = vunpack.c.l.b16 %v569
  %v602 = vunpack.c.l.b16 %v570
  %v603 = vunpack.c.l.b16 %v571
  %v604 = vpack.c.b16 %v589, %v588
  %v605 = vpack.c.b16 %v591, %v590
  %v606 = vpack.c.b16 %v593, %v592
  %v607 = vpack.c.b16 %v595, %v594
  %v608 = vpack.c.b16 %v597, %v596
  %v609 = vpack.c.b16 %v599, %v598
  %v610 = vpack.c.b16 %v601, %v600
  %v611 = vpack.c.b16 %v603, %v602
  %620 = vmatprep.subr.bf16.mxu0 0
  %621 = vmatpush1.bf16.msra.mxu0 %v604
  %622 = vmatprep.subr.bf16.mxu0 0
  %623 = vmatpush1.bf16.msra.mxu0 %v605
  %624 = vmatprep.subr.bf16.mxu0 0
  %625 = vmatpush1.bf16.msra.mxu0 %v606
  %626 = vmatprep.subr.bf16.mxu0 0
  %627 = vmatpush1.bf16.msra.mxu0 %v607
  %628 = vmatprep.subr.bf16.mxu0 0
  %629 = vmatpush1.bf16.msra.mxu0 %v608
  %630 = vmatprep.subr.bf16.mxu0 0
  %631 = vmatpush1.bf16.msra.mxu0 %v609
  %632 = vmatprep.subr.bf16.mxu0 0
  %633 = vmatpush1.bf16.msra.mxu0 %v610
  %634 = vmatprep.subr.bf16.mxu0 0
  %635 = vmatpush1.bf16.msra.mxu0 %v611
  %636 = vmatprep.subr.bf16.mxu0 0
  %637 = vmatpush1.bf16.msra.mxu0 0
  %638 = vmatprep.subr.bf16.mxu0 0
  %639 = vmatpush1.bf16.msra.mxu0 0
  %640 = vmatprep.subr.bf16.mxu0 0
  %641 = vmatpush1.bf16.msra.mxu0 0
  %642 = vmatprep.subr.bf16.mxu0 0
  %643 = vmatpush1.bf16.msra.mxu0 0
  %644 = vmatprep.subr.bf16.mxu0 0
  %645 = vmatpush1.bf16.msra.mxu0 0
  %646 = vmatprep.subr.bf16.mxu0 0
  %647 = vmatpush1.bf16.msra.mxu0 0
  %648 = vmatprep.subr.bf16.mxu0 0
  %649 = vmatpush1.bf16.msra.mxu0 0
  %650 = vmatprep.subr.bf16.mxu0 0
  %651 = vmatpush1.bf16.msra.mxu0 0
  %652 = vmatprep.mubr.bf16.mxu0 0
  %653 = vmatmul.mubr.bf16.gmra.mrb[0].mxu0 %v157
  %v654 = vpop.f32.mrb[0].mxu0
  %v655 = vadd.f32 0.0, %v654
  %v656 = vpop.f32.mrb[0].mxu0
  %v657 = vpop.f32.mrb[0].mxu0
  %v658 = vadd.f32 0.0, %v657
  %v659 = vpop.f32.mrb[0].mxu0
  %660 = vdwg.mxu0
  %v661 = vld [vmem:[%s1] sm:$0xff]
  %v662 = vld [vmem:[%s1 + $0x8] sm:$0xff]
  %v663 = vld [vmem:[%s1 + $0x10] sm:$0xff]
  %v664 = vld [vmem:[%s1 + $0x18] sm:$0xff]
  %v665 = vld [vmem:[%s1 + $0x20] sm:$0xff]
  %v666 = vld [vmem:[%s1 + $0x28] sm:$0xff]
  %v667 = vld [vmem:[%s1 + $0x30] sm:$0xff]
  %v668 = vld [vmem:[%s1 + $0x38] sm:$0xff]
  %v669 = vld [vmem:[%s1 + $0x40] sm:$0xff]
  %v670 = vld [vmem:[%s1 + $0x48] sm:$0xff]
  %v671 = vld [vmem:[%s1 + $0x50] sm:$0xff]
  %v672 = vld [vmem:[%s1 + $0x58] sm:$0xff]
  %v673 = vld [vmem:[%s1 + $0x60] sm:$0xff]
  %v674 = vld [vmem:[%s1 + $0x68] sm:$0xff]
  %vm675 = vcmask 130048
  %v677 = vsel %vm675, %v661, 0
  %v680 = vsel %vm675, %v662, 0
  %v683 = vsel %vm675, %v663, 0
  %v686 = vsel %vm675, %v664, 0
  %v689 = vsel %vm675, %v665, 0
  %v692 = vsel %vm675, %v666, 0
  %v695 = vsel %vm675, %v667, 0
  %v698 = vsel %vm675, %v668, 0
  %v701 = vsel %vm675, %v669, 0
  %v704 = vsel %vm675, %v670, 0
  %v707 = vsel %vm675, %v671, 0
  %v710 = vsel %vm675, %v672, 0
  %v713 = vsel %vm675, %v673, 0
  %v716 = vsel %vm675, %v674, 0
  %718 = vmatprep.subr.mxu0 %v549
  %719 = vmatpush1.msra.mxu0 %v547
  %720 = vmatprep.subr.mxu0 %v553
  %721 = vmatpush1.msra.mxu0 %v551
  %722 = vmatprep.subr.mxu0 0.0
  %723 = vmatpush1.msra.mxu0 0.0
  %724 = vmatprep.subr.mxu0 0.0
  %725 = vmatpush1.msra.mxu0 0.0
  %726 = vmatprep.subr.mxu0 0.0
  %727 = vmatpush1.msra.mxu0 0.0
  %728 = vmatprep.subr.mxu0 0.0
  %729 = vmatpush1.msra.mxu0 0.0
  %730 = vmatprep.subr.mxu0 0.0
  %731 = vmatpush1.msra.mxu0 0.0
  %732 = vmatprep.subr.mxu0 0.0
  %733 = vmatpush1.msra.mxu0 0.0
  %734 = vmatprep.subr.mxu0 0.0
  %735 = vmatpush1.msra.mxu0 0.0
  %736 = vmatprep.subr.mxu0 0.0
  %737 = vmatpush1.msra.mxu0 0.0
  %738 = vmatprep.subr.mxu0 0.0
  %739 = vmatpush1.msra.mxu0 0.0
  %740 = vmatprep.subr.mxu0 0.0
  %741 = vmatpush1.msra.mxu0 0.0
  %742 = vmatprep.subr.mxu0 0.0
  %743 = vmatpush1.msra.mxu0 0.0
  %744 = vmatprep.subr.mxu0 0.0
  %745 = vmatpush1.msra.mxu0 0.0
  %746 = vmatprep.subr.mxu0 0.0
  %747 = vmatpush1.msra.mxu0 0.0
  %748 = vmatprep.subr.mxu0 0.0
  %749 = vmatpush1.msra.mxu0 0.0
  %750 = vmatprep.subr.mxu0 0.0
  %751 = vmatpush1.msra.mxu0 0.0
  %752 = vmatprep.subr.mxu0 0.0
  %753 = vmatpush1.msra.mxu0 0.0
  %754 = vmatprep.subr.mxu0 0.0
  %755 = vmatpush1.msra.mxu0 0.0
  %756 = vmatprep.subr.mxu0 0.0
  %757 = vmatpush1.msra.mxu0 0.0
  %758 = vmatprep.subr.mxu0 0.0
  %759 = vmatpush1.msra.mxu0 0.0
  %760 = vmatprep.subr.mxu0 0.0
  %761 = vmatpush1.msra.mxu0 0.0
  %762 = vmatprep.subr.mxu0 0.0
  %763 = vmatpush1.msra.mxu0 0.0
  %764 = vmatprep.subr.mxu0 0.0
  %765 = vmatpush1.msra.mxu0 0.0
  %766 = vmatprep.subr.mxu0 0.0
  %767 = vmatpush1.msra.mxu0 0.0
  %768 = vmatprep.subr.mxu0 0.0
  %769 = vmatpush1.msra.mxu0 0.0
  %770 = vmatprep.subr.mxu0 0.0
  %771 = vmatpush1.msra.mxu0 0.0
  %772 = vmatprep.subr.mxu0 0.0
  %773 = vmatpush1.msra.mxu0 0.0
  %774 = vmatprep.subr.mxu0 0.0
  %775 = vmatpush1.msra.mxu0 0.0
  %776 = vmatprep.subr.mxu0 0.0
  %777 = vmatpush1.msra.mxu0 0.0
  %778 = vmatprep.subr.mxu0 0.0
  %779 = vmatpush1.msra.mxu0 0.0
  %780 = vmatprep.subr.mxu0 0.0
  %781 = vmatpush1.msra.mxu0 0.0
  %782 = vmatprep.mubr.f32.mxu0 0.0
  %783 = vmatmul.mubr.f32.gmra.mrb[0].mxu0 %v677
  %v784 = vpop.f32.mrb[0].mxu0
  %v785 = vadd.f32 0.0, %v784
  %v786 = vpop.f32.mrb[0].mxu0
  %v787 = vadd.f32 0.0, %v786
  %788 = vmatprep.mubr.f32.mxu0 0.0
  %789 = vmatmul.mubr.f32.gmra.mrb[0].mxu0 %v680
  %v790 = vpop.f32.mrb[0].mxu0
  %v791 = vadd.f32 0.0, %v790
  %v792 = vpop.f32.mrb[0].mxu0
  %v793 = vadd.f32 0.0, %v792
  %794 = vmatprep.mubr.f32.mxu0 0.0
  %795 = vmatmul.mubr.f32.gmra.mrb[0].mxu0 %v683
  %v796 = vpop.f32.mrb[0].mxu0
  %v797 = vadd.f32 0.0, %v796
  %v798 = vpop.f32.mrb[0].mxu0
  %v799 = vadd.f32 0.0, %v798
  %800 = vmatprep.mubr.f32.mxu0 0.0
  %801 = vmatmul.mubr.f32.gmra.mrb[0].mxu0 %v686
  %v802 = vpop.f32.mrb[0].mxu0
  %v803 = vadd.f32 0.0, %v802
  %v804 = vpop.f32.mrb[0].mxu0
  %v805 = vadd.f32 0.0, %v804
  %806 = vmatprep.mubr.f32.mxu0 0.0
  %807 = vmatmul.mubr.f32.gmra.mrb[0].mxu0 %v689
  %v808 = vpop.f32.mrb[0].mxu0
  %v809 = vadd.f32 0.0, %v808
  %v810 = vpop.f32.mrb[0].mxu0
  %v811 = vadd.f32 0.0, %v810
  %812 = vmatprep.mubr.f32.mxu0 0.0
  %813 = vmatmul.mubr.f32.gmra.mrb[0].mxu0 %v692
  %v814 = vpop.f32.mrb[0].mxu0
  %v815 = vadd.f32 0.0, %v814
  %v816 = vpop.f32.mrb[0].mxu0
  %v817 = vadd.f32 0.0, %v816
  %818 = vmatprep.mubr.f32.mxu0 0.0
  %819 = vmatmul.mubr.f32.gmra.mrb[0].mxu0 %v695
  %v820 = vpop.f32.mrb[0].mxu0
  %v821 = vadd.f32 0.0, %v820
  %v822 = vpop.f32.mrb[0].mxu0
  %v823 = vadd.f32 0.0, %v822
  %824 = vmatprep.mubr.f32.mxu0 0.0
  %825 = vmatmul.mubr.f32.gmra.mrb[0].mxu0 %v698
  %v826 = vpop.f32.mrb[0].mxu0
  %v827 = vadd.f32 0.0, %v826
  %v828 = vpop.f32.mrb[0].mxu0
  %v829 = vadd.f32 0.0, %v828
  %830 = vmatprep.mubr.f32.mxu0 0.0
  %831 = vmatmul.mubr.f32.gmra.mrb[0].mxu0 %v701
  %v832 = vpop.f32.mrb[0].mxu0
  %v833 = vadd.f32 0.0, %v832
  %v834 = vpop.f32.mrb[0].mxu0
  %v835 = vadd.f32 0.0, %v834
  %836 = vmatprep.mubr.f32.mxu0 0.0
  %837 = vmatmul.mubr.f32.gmra.mrb[0].mxu0 %v704
  %v838 = vpop.f32.mrb[0].mxu0
  %v839 = vadd.f32 0.0, %v838
  %v840 = vpop.f32.mrb[0].mxu0
  %v841 = vadd.f32 0.0, %v840
  %842 = vmatprep.mubr.f32.mxu0 0.0
  %843 = vmatmul.mubr.f32.gmra.mrb[0].mxu0 %v707
  %v844 = vpop.f32.mrb[0].mxu0
  %v845 = vadd.f32 0.0, %v844
  %v846 = vpop.f32.mrb[0].mxu0
  %v847 = vadd.f32 0.0, %v846
  %848 = vmatprep.mubr.f32.mxu0 0.0
  %849 = vmatmul.mubr.f32.gmra.mrb[0].mxu0 %v710
  %v850 = vpop.f32.mrb[0].mxu0
  %v851 = vadd.f32 0.0, %v850
  %v852 = vpop.f32.mrb[0].mxu0
  %v853 = vadd.f32 0.0, %v852
  %854 = vmatprep.mubr.f32.mxu0 0.0
  %855 = vmatmul.mubr.f32.gmra.mrb[0].mxu0 %v713
  %v856 = vpop.f32.mrb[0].mxu0
  %v857 = vadd.f32 0.0, %v856
  %v858 = vpop.f32.mrb[0].mxu0
  %v859 = vadd.f32 0.0, %v858
  %860 = vmatprep.mubr.f32.mxu0 0.0
  %861 = vmatmul.mubr.f32.gmra.mrb[0].mxu0 %v716
  %v862 = vpop.f32.mrb[0].mxu0
  %v863 = vadd.f32 0.0, %v862
  %v864 = vpop.f32.mrb[0].mxu0
  %v865 = vadd.f32 0.0, %v864
  %866 = vdwg.mxu0
  %867 = vmatprep.subr.mxu0 0.0
  %868 = vmatpush1.msra.mxu0 %v655
  %869 = vmatprep.subr.mxu0 0.0
  %870 = vmatpush1.msra.mxu0 %v658
  %871 = vmatprep.subr.mxu0 0.0
  %872 = vmatpush1.msra.mxu0 0.0
  %873 = vmatprep.subr.mxu0 0.0
  %874 = vmatpush1.msra.mxu0 0.0
  %875 = vmatprep.subr.mxu0 0.0
  %876 = vmatpush1.msra.mxu0 0.0
  %877 = vmatprep.subr.mxu0 0.0
  %878 = vmatpush1.msra.mxu0 0.0
  %879 = vmatprep.subr.mxu0 0.0
  %880 = vmatpush1.msra.mxu0 0.0
  %881 = vmatprep.subr.mxu0 0.0
  %882 = vmatpush1.msra.mxu0 0.0
  %883 = vmatprep.subr.mxu0 0.0
  %884 = vmatpush1.msra.mxu0 0.0
  %885 = vmatprep.subr.mxu0 0.0
  %886 = vmatpush1.msra.mxu0 0.0
  %887 = vmatprep.subr.mxu0 0.0
  %888 = vmatpush1.msra.mxu0 0.0
  %889 = vmatprep.subr.mxu0 0.0
  %890 = vmatpush1.msra.mxu0 0.0
  %891 = vmatprep.subr.mxu0 0.0
  %892 = vmatpush1.msra.mxu0 0.0
  %893 = vmatprep.subr.mxu0 0.0
  %894 = vmatpush1.msra.mxu0 0.0
  %895 = vmatprep.subr.mxu0 0.0
  %896 = vmatpush1.msra.mxu0 0.0
  %897 = vmatprep.subr.mxu0 0.0
  %898 = vmatpush1.msra.mxu0 0.0
  %899 = vmatprep.subr.mxu0 0.0
  %900 = vmatpush1.msra.mxu0 0.0
  %901 = vmatprep.subr.mxu0 0.0
  %902 = vmatpush1.msra.mxu0 0.0
  %903 = vmatprep.subr.mxu0 0.0
  %904 = vmatpush1.msra.mxu0 0.0
  %905 = vmatprep.subr.mxu0 0.0
  %906 = vmatpush1.msra.mxu0 0.0
  %907 = vmatprep.subr.mxu0 0.0
  %908 = vmatpush1.msra.mxu0 0.0
  %909 = vmatprep.subr.mxu0 0.0
  %910 = vmatpush1.msra.mxu0 0.0
  %911 = vmatprep.subr.mxu0 0.0
  %912 = vmatpush1.msra.mxu0 0.0
  %913 = vmatprep.subr.mxu0 0.0
  %914 = vmatpush1.msra.mxu0 0.0
  %915 = vmatprep.subr.mxu0 0.0
  %916 = vmatpush1.msra.mxu0 0.0
  %917 = vmatprep.subr.mxu0 0.0
  %918 = vmatpush1.msra.mxu0 0.0
  %919 = vmatprep.subr.mxu0 0.0
  %920 = vmatpush1.msra.mxu0 0.0
  %921 = vmatprep.subr.mxu0 0.0
  %922 = vmatpush1.msra.mxu0 0.0
  %923 = vmatprep.subr.mxu0 0.0
  %924 = vmatpush1.msra.mxu0 0.0
  %925 = vmatprep.subr.mxu0 0.0
  %926 = vmatpush1.msra.mxu0 0.0
  %927 = vmatprep.subr.mxu0 0.0
  %928 = vmatpush1.msra.mxu0 0.0
  %929 = vmatprep.subr.mxu0 0.0
  %930 = vmatpush1.msra.mxu0 0.0
  %931 = vmatprep.mubr.f32.mxu0 0.0
  %932 = vmatmul.mubr.f32.gmra.mrb[0].mxu0 %v677
  %v933 = vpop.f32.mrb[0].mxu0
  %v934 = vadd.f32 0.0, %v933
  %v935 = vpop.f32.mrb[0].mxu0
  %936 = vmatprep.mubr.f32.mxu0 0.0
  %937 = vmatmul.mubr.f32.gmra.mrb[0].mxu0 %v680
  %v938 = vpop.f32.mrb[0].mxu0
  %v939 = vadd.f32 0.0, %v938
  %v940 = vpop.f32.mrb[0].mxu0
  %941 = vmatprep.mubr.f32.mxu0 0.0
  %942 = vmatmul.mubr.f32.gmra.mrb[0].mxu0 %v683
  %v943 = vpop.f32.mrb[0].mxu0
  %v944 = vadd.f32 0.0, %v943
  %v945 = vpop.f32.mrb[0].mxu0
  %946 = vmatprep.mubr.f32.mxu0 0.0
  %947 = vmatmul.mubr.f32.gmra.mrb[0].mxu0 %v686
  %v948 = vpop.f32.mrb[0].mxu0
  %v949 = vadd.f32 0.0, %v948
  %v950 = vpop.f32.mrb[0].mxu0
  %951 = vmatprep.mubr.f32.mxu0 0.0
  %952 = vmatmul.mubr.f32.gmra.mrb[0].mxu0 %v689
  %v953 = vpop.f32.mrb[0].mxu0
  %v954 = vadd.f32 0.0, %v953
  %v955 = vpop.f32.mrb[0].mxu0
  %956 = vmatprep.mubr.f32.mxu0 0.0
  %957 = vmatmul.mubr.f32.gmra.mrb[0].mxu0 %v692
  %v958 = vpop.f32.mrb[0].mxu0
  %v959 = vadd.f32 0.0, %v958
  %v960 = vpop.f32.mrb[0].mxu0
  %961 = vmatprep.mubr.f32.mxu0 0.0
  %962 = vmatmul.mubr.f32.gmra.mrb[0].mxu0 %v695
  %v963 = vpop.f32.mrb[0].mxu0
  %v964 = vadd.f32 0.0, %v963
  %v965 = vpop.f32.mrb[0].mxu0
  %966 = vmatprep.mubr.f32.mxu0 0.0
  %967 = vmatmul.mubr.f32.gmra.mrb[0].mxu0 %v698
  %v968 = vpop.f32.mrb[0].mxu0
  %v969 = vadd.f32 0.0, %v968
  %v970 = vpop.f32.mrb[0].mxu0
  %971 = vmatprep.mubr.f32.mxu0 0.0
  %972 = vmatmul.mubr.f32.gmra.mrb[0].mxu0 %v701
  %v973 = vpop.f32.mrb[0].mxu0
  %v974 = vadd.f32 0.0, %v973
  %v975 = vpop.f32.mrb[0].mxu0
  %976 = vmatprep.mubr.f32.mxu0 0.0
  %977 = vmatmul.mubr.f32.gmra.mrb[0].mxu0 %v704
  %v978 = vpop.f32.mrb[0].mxu0
  %v979 = vadd.f32 0.0, %v978
  %v980 = vpop.f32.mrb[0].mxu0
  %981 = vmatprep.mubr.f32.mxu0 0.0
  %982 = vmatmul.mubr.f32.gmra.mrb[0].mxu0 %v707
  %v983 = vpop.f32.mrb[0].mxu0
  %v984 = vadd.f32 0.0, %v983
  %v985 = vpop.f32.mrb[0].mxu0
  %986 = vmatprep.mubr.f32.mxu0 0.0
  %987 = vmatmul.mubr.f32.gmra.mrb[0].mxu0 %v710
  %v988 = vpop.f32.mrb[0].mxu0
  %v989 = vadd.f32 0.0, %v988
  %v990 = vpop.f32.mrb[0].mxu0
  %991 = vmatprep.mubr.f32.mxu0 0.0
  %992 = vmatmul.mubr.f32.gmra.mrb[0].mxu0 %v713
  %v993 = vpop.f32.mrb[0].mxu0
  %v994 = vadd.f32 0.0, %v993
  %v995 = vpop.f32.mrb[0].mxu0
  %996 = vmatprep.mubr.f32.mxu0 0.0
  %997 = vmatmul.mubr.f32.gmra.mrb[0].mxu0 %v716
  %v998 = vpop.f32.mrb[0].mxu0
  %v999 = vadd.f32 0.0, %v998
  %v1000 = vpop.f32.mrb[0].mxu0
  %1001 = vdwg.mxu0
  %v1002 = vmul.f32 %v787, 0.5
  %v1003 = vmul.f32 %v793, 0.5
  %v1004 = vmul.f32 %v799, 0.5
  %v1005 = vmul.f32 %v805, 0.5
  %v1006 = vmul.f32 %v811, 0.5
  %v1007 = vmul.f32 %v817, 0.5
  %v1008 = vmul.f32 %v823, 0.5
  %v1009 = vmul.f32 %v829, 0.5
  %v1010 = vmul.f32 %v835, 0.5
  %v1011 = vmul.f32 %v841, 0.5
  %v1012 = vmul.f32 %v847, 0.5
  %v1013 = vmul.f32 %v853, 0.5
  %v1014 = vmul.f32 %v859, 0.5
  %v1015 = vmul.f32 %v865, 0.5
  %v1016 = vmul.f32 %v1002, 1.442695
  %v1017 = vpow.pop %v1016
  %v1018 = vmul.f32 %v1003, 1.442695
  %v1019 = vpow.pop %v1018
  %v1020 = vmul.f32 %v1004, 1.442695
  %v1021 = vpow.pop %v1020
  %v1022 = vmul.f32 %v1005, 1.442695
  %v1023 = vpow.pop %v1022
  %v1024 = vmul.f32 %v1006, 1.442695
  %v1025 = vpow.pop %v1024
  %v1026 = vmul.f32 %v1007, 1.442695
  %v1027 = vpow.pop %v1026
  %v1028 = vmul.f32 %v1008, 1.442695
  %v1029 = vpow.pop %v1028
  %v1030 = vmul.f32 %v1009, 1.442695
  %v1031 = vpow.pop %v1030
  %v1032 = vmul.f32 %v1010, 1.442695
  %v1033 = vpow.pop %v1032
  %v1034 = vmul.f32 %v1011, 1.442695
  %v1035 = vpow.pop %v1034
  %v1036 = vmul.f32 %v1012, 1.442695
  %v1037 = vpow.pop %v1036
  %v1038 = vmul.f32 %v1013, 1.442695
  %v1039 = vpow.pop %v1038
  %v1040 = vmul.f32 %v1014, 1.442695
  %v1041 = vpow.pop %v1040
  %v1042 = vmul.f32 %v1015, 1.442695
  %v1043 = vpow.pop %v1042
  %v1044 = vld [vmem:[%s2] sm:$0xff]
  %v1045 = vld [vmem:[%s2 + $0x8] sm:$0xff]
  %v1046 = vld [vmem:[%s2 + $0x10] sm:$0xff]
  %v1047 = vld [vmem:[%s2 + $0x18] sm:$0xff]
  %v1048 = vld [vmem:[%s2 + $0x20] sm:$0xff]
  %v1049 = vld [vmem:[%s2 + $0x28] sm:$0xff]
  %v1050 = vld [vmem:[%s2 + $0x30] sm:$0xff]
  %v1051 = vld [vmem:[%s2 + $0x38] sm:$0xff]
  %v1052 = vld [vmem:[%s2 + $0x40] sm:$0xff]
  %v1053 = vld [vmem:[%s2 + $0x48] sm:$0xff]
  %v1054 = vld [vmem:[%s2 + $0x50] sm:$0xff]
  %v1055 = vld [vmem:[%s2 + $0x58] sm:$0xff]
  %v1056 = vld [vmem:[%s2 + $0x60] sm:$0xff]
  %v1057 = vld [vmem:[%s2 + $0x68] sm:$0xff]
  %v1058 = vmul.f32 %v1017, %v1044
  %v1059 = vmul.f32 %v1019, %v1045
  %v1060 = vmul.f32 %v1021, %v1046
  %v1061 = vmul.f32 %v1023, %v1047
  %v1062 = vmul.f32 %v1025, %v1048
  %v1063 = vmul.f32 %v1027, %v1049
  %v1064 = vmul.f32 %v1029, %v1050
  %v1065 = vmul.f32 %v1031, %v1051
  %v1066 = vmul.f32 %v1033, %v1052
  %v1067 = vmul.f32 %v1035, %v1053
  %v1068 = vmul.f32 %v1037, %v1054
  %v1069 = vmul.f32 %v1039, %v1055
  %v1070 = vmul.f32 %v1041, %v1056
  %v1071 = vmul.f32 %v1043, %v1057
  %v1072 = vadd.f32 %v785, %v1058
  %v1073 = vadd.f32 %v791, %v1059
  %v1074 = vadd.f32 %v797, %v1060
  %v1075 = vadd.f32 %v803, %v1061
  %v1076 = vadd.f32 %v809, %v1062
  %v1077 = vadd.f32 %v815, %v1063
  %v1078 = vadd.f32 %v821, %v1064
  %v1079 = vadd.f32 %v827, %v1065
  %v1080 = vadd.f32 %v833, %v1066
  %v1081 = vadd.f32 %v839, %v1067
  %v1082 = vadd.f32 %v845, %v1068
  %v1083 = vadd.f32 %v851, %v1069
  %v1084 = vadd.f32 %v857, %v1070
  %v1085 = vadd.f32 %v863, %v1071
  %v1086 = vpack.c.bf16 %v1073, %v1072
  %v1087 = vpack.c.bf16 %v1075, %v1074
  %v1088 = vpack.c.bf16 %v1077, %v1076
  %v1089 = vpack.c.bf16 %v1079, %v1078
  %v1090 = vpack.c.bf16 %v1081, %v1080
  %v1091 = vpack.c.bf16 %v1083, %v1082
  %v1092 = vpack.c.bf16 %v1085, %v1084
  %v1093 = vld [vmem:[%s7] sm:$0xf]
  %v1094 = vld [vmem:[%s7 + $0x4] sm:$0xf]
  %v1095 = vld [vmem:[%s7 + $0x8] sm:$0xf]
  %v1096 = vld [vmem:[%s7 + $0xc] sm:$0xf]
  %v1097 = vld [vmem:[%s7 + $0x10] sm:$0xf]
  %v1098 = vld [vmem:[%s7 + $0x14] sm:$0xf]
  %v1099 = vld [vmem:[%s7 + $0x18] sm:$0xf]
  %v1100 = vld [vmem:[%s7 + $0x1c] sm:$0xf]
  %v1101 = vld [vmem:[%s7 + $0x20] sm:$0xf]
  %v1102 = vld [vmem:[%s7 + $0x24] sm:$0xf]
  %v1103 = vld [vmem:[%s7 + $0x28] sm:$0xf]
  %v1104 = vld [vmem:[%s7 + $0x2c] sm:$0xf]
  %v1105 = vld [vmem:[%s7 + $0x30] sm:$0xf]
  %v1106 = vld [vmem:[%s7 + $0x34] sm:$0xf]
  %v1107 = vld [vmem:[%s7 + $0x38] sm:$0xf]
  %v1108 = vld [vmem:[%s7 + $0x3c] sm:$0xf]
  %v1125 = vunpack.c.l.b16 %v1093
  %v1126 = vunpack.c.l.b16 %v1094
  %v1127 = vunpack.c.l.b16 %v1095
  %v1128 = vunpack.c.l.b16 %v1096
  %v1129 = vunpack.c.l.b16 %v1097
  %v1130 = vunpack.c.l.b16 %v1098
  %v1131 = vunpack.c.l.b16 %v1099
  %v1132 = vunpack.c.l.b16 %v1100
  %v1133 = vunpack.c.l.b16 %v1101
  %v1134 = vunpack.c.l.b16 %v1102
  %v1135 = vunpack.c.l.b16 %v1103
  %v1136 = vunpack.c.l.b16 %v1104
  %v1137 = vunpack.c.l.b16 %v1105
  %v1138 = vunpack.c.l.b16 %v1106
  %v1139 = vunpack.c.l.b16 %v1107
  %v1140 = vunpack.c.l.b16 %v1108
  %v1141 = vpack.c.b16 %v1126, %v1125
  %v1142 = vpack.c.b16 %v1128, %v1127
  %v1143 = vpack.c.b16 %v1130, %v1129
  %v1144 = vpack.c.b16 %v1132, %v1131
  %v1145 = vpack.c.b16 %v1134, %v1133
  %v1146 = vpack.c.b16 %v1136, %v1135
  %v1147 = vpack.c.b16 %v1138, %v1137
  %v1148 = vpack.c.b16 %v1140, %v1139
  %1157 = vmatprep.subr.bf16.mxu0 0
  %1158 = vmatpush1.bf16.msra.mxu0 %v1141
  %1159 = vmatprep.subr.bf16.mxu0 0
  %1160 = vmatpush1.bf16.msra.mxu0 %v1142
  %1161 = vmatprep.subr.bf16.mxu0 0
  %1162 = vmatpush1.bf16.msra.mxu0 %v1143
  %1163 = vmatprep.subr.bf16.mxu0 0
  %1164 = vmatpush1.bf16.msra.mxu0 %v1144
  %1165 = vmatprep.subr.bf16.mxu0 0
  %1166 = vmatpush1.bf16.msra.mxu0 %v1145
  %1167 = vmatprep.subr.bf16.mxu0 0
  %1168 = vmatpush1.bf16.msra.mxu0 %v1146
  %1169 = vmatprep.subr.bf16.mxu0 0
  %1170 = vmatpush1.bf16.msra.mxu0 %v1147
  %1171 = vmatprep.subr.bf16.mxu0 0
  %1172 = vmatpush1.bf16.msra.mxu0 %v1148
  %1173 = vmatprep.subr.bf16.mxu0 0
  %1174 = vmatpush1.bf16.msra.mxu0 0
  %1175 = vmatprep.subr.bf16.mxu0 0
  %1176 = vmatpush1.bf16.msra.mxu0 0
  %1177 = vmatprep.subr.bf16.mxu0 0
  %1178 = vmatpush1.bf16.msra.mxu0 0
  %1179 = vmatprep.subr.bf16.mxu0 0
  %1180 = vmatpush1.bf16.msra.mxu0 0
  %1181 = vmatprep.subr.bf16.mxu0 0
  %1182 = vmatpush1.bf16.msra.mxu0 0
  %1183 = vmatprep.subr.bf16.mxu0 0
  %1184 = vmatpush1.bf16.msra.mxu0 0
  %1185 = vmatprep.subr.bf16.mxu0 0
  %1186 = vmatpush1.bf16.msra.mxu0 0
  %1187 = vmatprep.subr.bf16.mxu0 0
  %1188 = vmatpush1.bf16.msra.mxu0 0
  %1189 = vmatprep.mubr.bf16.mxu0 0
  %1190 = vmatmul.mubr.bf16.gmra.mrb[0].mxu0 %v1086
  %v1191 = vpop.f32.mrb[0].mxu0
  %v1192 = vadd.f32 %v934, %v1191
  %v1193 = vpop.f32.mrb[0].mxu0
  %v1194 = vpop.f32.mrb[0].mxu0
  %v1195 = vadd.f32 %v939, %v1194
  %v1196 = vpop.f32.mrb[0].mxu0
  %1197 = vmatprep.mubr.bf16.mxu0 0
  %1198 = vmatmul.mubr.bf16.gmra.mrb[0].mxu0 %v1087
  %v1199 = vpop.f32.mrb[0].mxu0
  %v1200 = vadd.f32 %v944, %v1199
  %v1201 = vpop.f32.mrb[0].mxu0
  %v1202 = vpop.f32.mrb[0].mxu0
  %v1203 = vadd.f32 %v949, %v1202
  %v1204 = vpop.f32.mrb[0].mxu0
  %1205 = vmatprep.mubr.bf16.mxu0 0
  %1206 = vmatmul.mubr.bf16.gmra.mrb[0].mxu0 %v1088
  %v1207 = vpop.f32.mrb[0].mxu0
  %v1208 = vadd.f32 %v954, %v1207
  %v1209 = vpop.f32.mrb[0].mxu0
  %v1210 = vpop.f32.mrb[0].mxu0
  %v1211 = vadd.f32 %v959, %v1210
  %v1212 = vpop.f32.mrb[0].mxu0
  %1213 = vmatprep.mubr.bf16.mxu0 0
  %1214 = vmatmul.mubr.bf16.gmra.mrb[0].mxu0 %v1089
  %v1215 = vpop.f32.mrb[0].mxu0
  %v1216 = vadd.f32 %v964, %v1215
  %v1217 = vpop.f32.mrb[0].mxu0
  %v1218 = vpop.f32.mrb[0].mxu0
  %v1219 = vadd.f32 %v969, %v1218
  %v1220 = vpop.f32.mrb[0].mxu0
  %1221 = vmatprep.mubr.bf16.mxu0 0
  %1222 = vmatmul.mubr.bf16.gmra.mrb[0].mxu0 %v1090
  %v1223 = vpop.f32.mrb[0].mxu0
  %v1224 = vadd.f32 %v974, %v1223
  %v1225 = vpop.f32.mrb[0].mxu0
  %v1226 = vpop.f32.mrb[0].mxu0
  %v1227 = vadd.f32 %v979, %v1226
  %v1228 = vpop.f32.mrb[0].mxu0
  %1229 = vmatprep.mubr.bf16.mxu0 0
  %1230 = vmatmul.mubr.bf16.gmra.mrb[0].mxu0 %v1091
  %v1231 = vpop.f32.mrb[0].mxu0
  %v1232 = vadd.f32 %v984, %v1231
  %v1233 = vpop.f32.mrb[0].mxu0
  %v1234 = vpop.f32.mrb[0].mxu0
  %v1235 = vadd.f32 %v989, %v1234
  %v1236 = vpop.f32.mrb[0].mxu0
  %1237 = vmatprep.mubr.bf16.mxu0 0
  %1238 = vmatmul.mubr.bf16.gmra.mrb[0].mxu0 %v1092
  %v1239 = vpop.f32.mrb[0].mxu0
  %v1240 = vadd.f32 %v994, %v1239
  %v1241 = vpop.f32.mrb[0].mxu0
  %v1242 = vpop.f32.mrb[0].mxu0
  %v1243 = vadd.f32 %v999, %v1242
  %v1244 = vpop.f32.mrb[0].mxu0
  %1245 = vdwg.mxu0
  %v1246 = vlaneseq
  %v1247 = vshrl.u32 %v1246, 7
  %v1248 = vsub.s32 4, %v1247
  %v1249 = vrot.slane %v38, %v1248
  %v1250 = vadd.f32 %v1192, %v1249
  %v1251 = vadd.f32 %v1195, %v1249
  %v1252 = vadd.f32 %v1200, %v1249
  %v1253 = vadd.f32 %v1203, %v1249
  %v1254 = vadd.f32 %v1208, %v1249
  %v1255 = vadd.f32 %v1211, %v1249
  %v1256 = vadd.f32 %v1216, %v1249
  %v1257 = vadd.f32 %v1219, %v1249
  %v1258 = vadd.f32 %v1224, %v1249
  %v1259 = vadd.f32 %v1227, %v1249
  %v1260 = vadd.f32 %v1232, %v1249
  %v1261 = vadd.f32 %v1235, %v1249
  %v1262 = vadd.f32 %v1240, %v1249
  %v1263 = vadd.f32 %v1243, %v1249
  %v1264 = vxor.u32 %v1250, 2147483648
  %v1265 = vxor.u32 %v1251, 2147483648
  %v1266 = vxor.u32 %v1252, 2147483648
  %v1267 = vxor.u32 %v1253, 2147483648
  %v1268 = vxor.u32 %v1254, 2147483648
  %v1269 = vxor.u32 %v1255, 2147483648
  %v1270 = vxor.u32 %v1256, 2147483648
  %v1271 = vxor.u32 %v1257, 2147483648
  %v1272 = vxor.u32 %v1258, 2147483648
  %v1273 = vxor.u32 %v1259, 2147483648
  %v1274 = vxor.u32 %v1260, 2147483648
  %v1275 = vxor.u32 %v1261, 2147483648
  %v1276 = vxor.u32 %v1262, 2147483648
  %v1277 = vxor.u32 %v1263, 2147483648
  %v1278 = vmul.f32 %v1264, 1.442695
  %v1279 = vpow.pop %v1278
  %v1280 = vmul.f32 %v1265, 1.442695
  %v1281 = vpow.pop %v1280
  %v1282 = vmul.f32 %v1266, 1.442695
  %v1283 = vpow.pop %v1282
  %v1284 = vmul.f32 %v1267, 1.442695
  %v1285 = vpow.pop %v1284
  %v1286 = vmul.f32 %v1268, 1.442695
  %v1287 = vpow.pop %v1286
  %v1288 = vmul.f32 %v1269, 1.442695
  %v1289 = vpow.pop %v1288
  %v1290 = vmul.f32 %v1270, 1.442695
  %v1291 = vpow.pop %v1290
  %v1292 = vmul.f32 %v1271, 1.442695
  %v1293 = vpow.pop %v1292
  %v1294 = vmul.f32 %v1272, 1.442695
  %v1295 = vpow.pop %v1294
  %v1296 = vmul.f32 %v1273, 1.442695
  %v1297 = vpow.pop %v1296
  %v1298 = vmul.f32 %v1274, 1.442695
  %v1299 = vpow.pop %v1298
  %v1300 = vmul.f32 %v1275, 1.442695
  %v1301 = vpow.pop %v1300
  %v1302 = vmul.f32 %v1276, 1.442695
  %v1303 = vpow.pop %v1302
  %v1304 = vmul.f32 %v1277, 1.442695
  %v1305 = vpow.pop %v1304
  %v1306 = vadd.f32 %v1279, 1.0
  %v1307 = vadd.f32 %v1281, 1.0
  %v1308 = vadd.f32 %v1283, 1.0
  %v1309 = vadd.f32 %v1285, 1.0
  %v1310 = vadd.f32 %v1287, 1.0
  %v1311 = vadd.f32 %v1289, 1.0
  %v1312 = vadd.f32 %v1291, 1.0
  %v1313 = vadd.f32 %v1293, 1.0
  %v1314 = vadd.f32 %v1295, 1.0
  %v1315 = vadd.f32 %v1297, 1.0
  %v1316 = vadd.f32 %v1299, 1.0
  %v1317 = vadd.f32 %v1301, 1.0
  %v1318 = vadd.f32 %v1303, 1.0
  %v1319 = vadd.f32 %v1305, 1.0
  %v1320 = vrcp.pop %v1306
  %v1321 = vmul.f32 1.0, %v1320
  %v1322 = vrcp.pop %v1307
  %v1323 = vmul.f32 1.0, %v1322
  %v1324 = vrcp.pop %v1308
  %v1325 = vmul.f32 1.0, %v1324
  %v1326 = vrcp.pop %v1309
  %v1327 = vmul.f32 1.0, %v1326
  %v1328 = vrcp.pop %v1310
  %v1329 = vmul.f32 1.0, %v1328
  %v1330 = vrcp.pop %v1311
  %v1331 = vmul.f32 1.0, %v1330
  %v1332 = vrcp.pop %v1312
  %v1333 = vmul.f32 1.0, %v1332
  %v1334 = vrcp.pop %v1313
  %v1335 = vmul.f32 1.0, %v1334
  %v1336 = vrcp.pop %v1314
  %v1337 = vmul.f32 1.0, %v1336
  %v1338 = vrcp.pop %v1315
  %v1339 = vmul.f32 1.0, %v1338
  %v1340 = vrcp.pop %v1316
  %v1341 = vmul.f32 1.0, %v1340
  %v1342 = vrcp.pop %v1317
  %v1343 = vmul.f32 1.0, %v1342
  %v1344 = vrcp.pop %v1318
  %v1345 = vmul.f32 1.0, %v1344
  %v1346 = vrcp.pop %v1319
  %v1347 = vmul.f32 1.0, %v1346
  %v1348 = vmul.f32 %v1250, %v1321
  %v1349 = vmul.f32 %v1251, %v1323
  %v1350 = vmul.f32 %v1252, %v1325
  %v1351 = vmul.f32 %v1253, %v1327
  %v1352 = vmul.f32 %v1254, %v1329
  %v1353 = vmul.f32 %v1255, %v1331
  %v1354 = vmul.f32 %v1256, %v1333
  %v1355 = vmul.f32 %v1257, %v1335
  %v1356 = vmul.f32 %v1258, %v1337
  %v1357 = vmul.f32 %v1259, %v1339
  %v1358 = vmul.f32 %v1260, %v1341
  %v1359 = vmul.f32 %v1261, %v1343
  %v1360 = vmul.f32 %v1262, %v1345
  %v1361 = vmul.f32 %v1263, %v1347
  %v1362 = vpack.c.bf16 %v1349, %v1348
  %v1363 = vpack.c.bf16 %v1351, %v1350
  %v1364 = vpack.c.bf16 %v1353, %v1352
  %v1365 = vpack.c.bf16 %v1355, %v1354
  %v1366 = vpack.c.bf16 %v1357, %v1356
  %v1367 = vpack.c.bf16 %v1359, %v1358
  %v1368 = vpack.c.bf16 %v1361, %v1360
  %v1369 = vld [vmem:[%s8] sm:$0xff]
  %v1370 = vld [vmem:[%s8 + $0x8] sm:$0xff]
  %v1371 = vld [vmem:[%s8 + $0x10] sm:$0xff]
  %v1372 = vld [vmem:[%s8 + $0x18] sm:$0xff]
  %v1373 = vld [vmem:[%s8 + $0x20] sm:$0xff]
  %v1374 = vld [vmem:[%s8 + $0x28] sm:$0xff]
  %v1375 = vld [vmem:[%s8 + $0x30] sm:$0xff]
  %v1376 = vld [vmem:[%s8 + $0x38] sm:$0xff]
  %v1377 = vld [vmem:[%s8 + $0x40] sm:$0xff]
  %v1378 = vld [vmem:[%s8 + $0x48] sm:$0xff]
  %v1379 = vld [vmem:[%s8 + $0x50] sm:$0xff]
  %v1380 = vld [vmem:[%s8 + $0x58] sm:$0xff]
  %v1381 = vld [vmem:[%s8 + $0x60] sm:$0xff]
  %v1382 = vld [vmem:[%s8 + $0x68] sm:$0xff]
  %v1383 = vld [vmem:[%s8 + $0x70] sm:$0xff]
  %v1384 = vld [vmem:[%s8 + $0x78] sm:$0xff]
  %v1385 = vlaneseq
  %v1386 = vshrl.u32 %v1385, 7
  %v1387 = vsub.s32 5, %v1386
  %v1388 = vrot.slane %v38, %v1387
  %v1389 = vlaneseq
  %v1390 = vshrl.u32 %v1389, 7
  %v1391 = vsub.s32 5, %v1390
  %v1392 = vrot.slane %v39, %v1391
  %v1409 = vunpack.c.l.b16 %v1369
  %v1410 = vunpack.c.h.b16 %v1369
  %v1411 = vunpack.c.l.b16 %v1370
  %v1412 = vunpack.c.h.b16 %v1370
  %v1413 = vunpack.c.l.b16 %v1371
  %v1414 = vunpack.c.h.b16 %v1371
  %v1415 = vunpack.c.l.b16 %v1372
  %v1416 = vunpack.c.h.b16 %v1372
  %v1417 = vunpack.c.l.b16 %v1373
  %v1418 = vunpack.c.h.b16 %v1373
  %v1419 = vunpack.c.l.b16 %v1374
  %v1420 = vunpack.c.h.b16 %v1374
  %v1421 = vunpack.c.l.b16 %v1375
  %v1422 = vunpack.c.h.b16 %v1375
  %v1423 = vunpack.c.l.b16 %v1376
  %v1424 = vunpack.c.h.b16 %v1376
  %v1425 = vunpack.c.l.b16 %v1377
  %v1426 = vunpack.c.h.b16 %v1377
  %v1427 = vunpack.c.l.b16 %v1378
  %v1428 = vunpack.c.h.b16 %v1378
  %v1429 = vunpack.c.l.b16 %v1379
  %v1430 = vunpack.c.h.b16 %v1379
  %v1431 = vunpack.c.l.b16 %v1380
  %v1432 = vunpack.c.h.b16 %v1380
  %v1433 = vunpack.c.l.b16 %v1381
  %v1434 = vunpack.c.h.b16 %v1381
  %v1435 = vunpack.c.l.b16 %v1382
  %v1436 = vunpack.c.h.b16 %v1382
  %v1437 = vunpack.c.l.b16 %v1383
  %v1438 = vunpack.c.h.b16 %v1383
  %v1439 = vunpack.c.l.b16 %v1384
  %v1440 = vunpack.c.h.b16 %v1384
  %v1441 = vpack.c.b16 %v1411, %v1409
  %v1442 = vpack.c.b16 %v1412, %v1410
  %v1443 = vpack.c.b16 %v1415, %v1413
  %v1444 = vpack.c.b16 %v1416, %v1414
  %v1445 = vpack.c.b16 %v1419, %v1417
  %v1446 = vpack.c.b16 %v1420, %v1418
  %v1447 = vpack.c.b16 %v1423, %v1421
  %v1448 = vpack.c.b16 %v1424, %v1422
  %v1449 = vpack.c.b16 %v1427, %v1425
  %v1450 = vpack.c.b16 %v1428, %v1426
  %v1451 = vpack.c.b16 %v1431, %v1429
  %v1452 = vpack.c.b16 %v1432, %v1430
  %v1453 = vpack.c.b16 %v1435, %v1433
  %v1454 = vpack.c.b16 %v1436, %v1434
  %v1455 = vpack.c.b16 %v1439, %v1437
  %v1456 = vpack.c.b16 %v1440, %v1438
  %1473 = vmatprep.subr.bf16.mxu0 %v1442
  %1474 = vmatpush1.bf16.msra.mxu0 %v1441
  %1475 = vmatprep.subr.bf16.mxu0 %v1444
  %1476 = vmatpush1.bf16.msra.mxu0 %v1443
  %1477 = vmatprep.subr.bf16.mxu0 %v1446
  %1478 = vmatpush1.bf16.msra.mxu0 %v1445
  %1479 = vmatprep.subr.bf16.mxu0 %v1448
  %1480 = vmatpush1.bf16.msra.mxu0 %v1447
  %1481 = vmatprep.subr.bf16.mxu0 %v1450
  %1482 = vmatpush1.bf16.msra.mxu0 %v1449
  %1483 = vmatprep.subr.bf16.mxu0 %v1452
  %1484 = vmatpush1.bf16.msra.mxu0 %v1451
  %1485 = vmatprep.subr.bf16.mxu0 %v1454
  %1486 = vmatpush1.bf16.msra.mxu0 %v1453
  %1487 = vmatprep.subr.bf16.mxu0 %v1456
  %1488 = vmatpush1.bf16.msra.mxu0 %v1455
  %1489 = vmatprep.subr.bf16.mxu0 0
  %1490 = vmatpush1.bf16.msra.mxu0 0
  %1491 = vmatprep.subr.bf16.mxu0 0
  %1492 = vmatpush1.bf16.msra.mxu0 0
  %1493 = vmatprep.subr.bf16.mxu0 0
  %1494 = vmatpush1.bf16.msra.mxu0 0
  %1495 = vmatprep.subr.bf16.mxu0 0
  %1496 = vmatpush1.bf16.msra.mxu0 0
  %1497 = vmatprep.subr.bf16.mxu0 0
  %1498 = vmatpush1.bf16.msra.mxu0 0
  %1499 = vmatprep.subr.bf16.mxu0 0
  %1500 = vmatpush1.bf16.msra.mxu0 0
  %1501 = vmatprep.subr.bf16.mxu0 0
  %1502 = vmatpush1.bf16.msra.mxu0 0
  %1503 = vmatprep.subr.bf16.mxu0 0
  %1504 = vmatpush1.bf16.msra.mxu0 0
  %1505 = vmatprep.mubr.bf16.mxu0 0
  %1506 = vmatmul.mubr.bf16.gmra.mrb[0].mxu0 %v1362
  %v1507 = vpop.f32.mrb[0].mxu0
  %v1508 = vadd.f32 %v1388, %v1507
  %v1509 = vpop.f32.mrb[0].mxu0
  %v1510 = vadd.f32 %v1392, %v1509
  %v1511 = vpop.f32.mrb[0].mxu0
  %v1512 = vadd.f32 %v1388, %v1511
  %v1513 = vpop.f32.mrb[0].mxu0
  %v1514 = vadd.f32 %v1392, %v1513
  %1515 = vmatprep.mubr.bf16.mxu0 0
  %1516 = vmatmul.mubr.bf16.gmra.mrb[0].mxu0 %v1363
  %v1517 = vpop.f32.mrb[0].mxu0
  %v1518 = vadd.f32 %v1388, %v1517
  %v1519 = vpop.f32.mrb[0].mxu0
  %v1520 = vadd.f32 %v1392, %v1519
  %v1521 = vpop.f32.mrb[0].mxu0
  %v1522 = vadd.f32 %v1388, %v1521
  %v1523 = vpop.f32.mrb[0].mxu0
  %v1524 = vadd.f32 %v1392, %v1523
  %1525 = vmatprep.mubr.bf16.mxu0 0
  %1526 = vmatmul.mubr.bf16.gmra.mrb[0].mxu0 %v1364
  %v1527 = vpop.f32.mrb[0].mxu0
  %v1528 = vadd.f32 %v1388, %v1527
  %v1529 = vpop.f32.mrb[0].mxu0
  %v1530 = vadd.f32 %v1392, %v1529
  %v1531 = vpop.f32.mrb[0].mxu0
  %v1532 = vadd.f32 %v1388, %v1531
  %v1533 = vpop.f32.mrb[0].mxu0
  %v1534 = vadd.f32 %v1392, %v1533
  %1535 = vmatprep.mubr.bf16.mxu0 0
  %1536 = vmatmul.mubr.bf16.gmra.mrb[0].mxu0 %v1365
  %v1537 = vpop.f32.mrb[0].mxu0
  %v1538 = vadd.f32 %v1388, %v1537
  %v1539 = vpop.f32.mrb[0].mxu0
  %v1540 = vadd.f32 %v1392, %v1539
  %v1541 = vpop.f32.mrb[0].mxu0
  %v1542 = vadd.f32 %v1388, %v1541
  %v1543 = vpop.f32.mrb[0].mxu0
  %v1544 = vadd.f32 %v1392, %v1543
  %1545 = vmatprep.mubr.bf16.mxu0 0
  %1546 = vmatmul.mubr.bf16.gmra.mrb[0].mxu0 %v1366
  %v1547 = vpop.f32.mrb[0].mxu0
  %v1548 = vadd.f32 %v1388, %v1547
  %v1549 = vpop.f32.mrb[0].mxu0
  %v1550 = vadd.f32 %v1392, %v1549
  %v1551 = vpop.f32.mrb[0].mxu0
  %v1552 = vadd.f32 %v1388, %v1551
  %v1553 = vpop.f32.mrb[0].mxu0
  %v1554 = vadd.f32 %v1392, %v1553
  %1555 = vmatprep.mubr.bf16.mxu0 0
  %1556 = vmatmul.mubr.bf16.gmra.mrb[0].mxu0 %v1367
  %v1557 = vpop.f32.mrb[0].mxu0
  %v1558 = vadd.f32 %v1388, %v1557
  %v1559 = vpop.f32.mrb[0].mxu0
  %v1560 = vadd.f32 %v1392, %v1559
  %v1561 = vpop.f32.mrb[0].mxu0
  %v1562 = vadd.f32 %v1388, %v1561
  %v1563 = vpop.f32.mrb[0].mxu0
  %v1564 = vadd.f32 %v1392, %v1563
  %1565 = vmatprep.mubr.bf16.mxu0 0
  %1566 = vmatmul.mubr.bf16.gmra.mrb[0].mxu0 %v1368
  %v1567 = vpop.f32.mrb[0].mxu0
  %v1568 = vadd.f32 %v1388, %v1567
  %v1569 = vpop.f32.mrb[0].mxu0
  %v1570 = vadd.f32 %v1392, %v1569
  %v1571 = vpop.f32.mrb[0].mxu0
  %v1572 = vadd.f32 %v1388, %v1571
  %v1573 = vpop.f32.mrb[0].mxu0
  %v1574 = vadd.f32 %v1392, %v1573
  %1575 = vdwg.mxu0
  %s1576 = scalar_lea.vmem %s5, 128
  %v1577 = vld [vmem:[%s1576] sm:$0xf]
  %v1578 = vld [vmem:[%s1576 + $0x4] sm:$0xf]
  %v1579 = vld [vmem:[%s1576 + $0x8] sm:$0xf]
  %v1580 = vld [vmem:[%s1576 + $0xc] sm:$0xf]
  %v1581 = vld [vmem:[%s1576 + $0x10] sm:$0xf]
  %v1582 = vld [vmem:[%s1576 + $0x14] sm:$0xf]
  %v1583 = vld [vmem:[%s1576 + $0x18] sm:$0xf]
  %v1584 = vld [vmem:[%s1576 + $0x1c] sm:$0xf]
  %v1585 = vld [vmem:[%s1576 + $0x20] sm:$0xf]
  %v1586 = vld [vmem:[%s1576 + $0x24] sm:$0xf]
  %v1587 = vld [vmem:[%s1576 + $0x28] sm:$0xf]
  %v1588 = vld [vmem:[%s1576 + $0x2c] sm:$0xf]
  %v1589 = vld [vmem:[%s1576 + $0x30] sm:$0xf]
  %v1590 = vld [vmem:[%s1576 + $0x34] sm:$0xf]
  %v1591 = vld [vmem:[%s1576 + $0x38] sm:$0xf]
  %v1592 = vld [vmem:[%s1576 + $0x3c] sm:$0xf]
  %v1593 = vlaneseq
  %v1594 = vshrl.u32 %v1593, 7
  %v1595 = vsub.s32 6, %v1594
  %v1596 = vrot.slane %v38, %v1595
  %v1613 = vunpack.c.l.b16 %v1577
  %v1614 = vunpack.c.l.b16 %v1578
  %v1615 = vunpack.c.l.b16 %v1579
  %v1616 = vunpack.c.l.b16 %v1580
  %v1617 = vunpack.c.l.b16 %v1581
  %v1618 = vunpack.c.l.b16 %v1582
  %v1619 = vunpack.c.l.b16 %v1583
  %v1620 = vunpack.c.l.b16 %v1584
  %v1621 = vunpack.c.l.b16 %v1585
  %v1622 = vunpack.c.l.b16 %v1586
  %v1623 = vunpack.c.l.b16 %v1587
  %v1624 = vunpack.c.l.b16 %v1588
  %v1625 = vunpack.c.l.b16 %v1589
  %v1626 = vunpack.c.l.b16 %v1590
  %v1627 = vunpack.c.l.b16 %v1591
  %v1628 = vunpack.c.l.b16 %v1592
  %v1629 = vpack.c.b16 %v1614, %v1613
  %v1630 = vpack.c.b16 %v1616, %v1615
  %v1631 = vpack.c.b16 %v1618, %v1617
  %v1632 = vpack.c.b16 %v1620, %v1619
  %v1633 = vpack.c.b16 %v1622, %v1621
  %v1634 = vpack.c.b16 %v1624, %v1623
  %v1635 = vpack.c.b16 %v1626, %v1625
  %v1636 = vpack.c.b16 %v1628, %v1627
  %1645 = vmatprep.subr.bf16.mxu0 0
  %1646 = vmatpush1.bf16.msra.mxu0 %v1629
  %1647 = vmatprep.subr.bf16.mxu0 0
  %1648 = vmatpush1.bf16.msra.mxu0 %v1630
  %1649 = vmatprep.subr.bf16.mxu0 0
  %1650 = vmatpush1.bf16.msra.mxu0 %v1631
  %1651 = vmatprep.subr.bf16.mxu0 0
  %1652 = vmatpush1.bf16.msra.mxu0 %v1632
  %1653 = vmatprep.subr.bf16.mxu0 0
  %1654 = vmatpush1.bf16.msra.mxu0 %v1633
  %1655 = vmatprep.subr.bf16.mxu0 0
  %1656 = vmatpush1.bf16.msra.mxu0 %v1634
  %1657 = vmatprep.subr.bf16.mxu0 0
  %1658 = vmatpush1.bf16.msra.mxu0 %v1635
  %1659 = vmatprep.subr.bf16.mxu0 0
  %1660 = vmatpush1.bf16.msra.mxu0 %v1636
  %1661 = vmatprep.subr.bf16.mxu0 0
  %1662 = vmatpush1.bf16.msra.mxu0 0
  %1663 = vmatprep.subr.bf16.mxu0 0
  %1664 = vmatpush1.bf16.msra.mxu0 0
  %1665 = vmatprep.subr.bf16.mxu0 0
  %1666 = vmatpush1.bf16.msra.mxu0 0
  %1667 = vmatprep.subr.bf16.mxu0 0
  %1668 = vmatpush1.bf16.msra.mxu0 0
  %1669 = vmatprep.subr.bf16.mxu0 0
  %1670 = vmatpush1.bf16.msra.mxu0 0
  %1671 = vmatprep.subr.bf16.mxu0 0
  %1672 = vmatpush1.bf16.msra.mxu0 0
  %1673 = vmatprep.subr.bf16.mxu0 0
  %1674 = vmatpush1.bf16.msra.mxu0 0
  %1675 = vmatprep.subr.bf16.mxu0 0
  %1676 = vmatpush1.bf16.msra.mxu0 0
  %1677 = vmatprep.mubr.bf16.mxu0 0
  %1678 = vmatmul.mubr.bf16.gmra.mrb[0].mxu0 %v1086
  %v1679 = vpop.f32.mrb[0].mxu0
  %v1680 = vadd.f32 %v1596, %v1679
  %v1681 = vpop.f32.mrb[0].mxu0
  %v1682 = vpop.f32.mrb[0].mxu0
  %v1683 = vadd.f32 %v1596, %v1682
  %v1684 = vpop.f32.mrb[0].mxu0
  %1685 = vmatprep.mubr.bf16.mxu0 0
  %1686 = vmatmul.mubr.bf16.gmra.mrb[0].mxu0 %v1087
  %v1687 = vpop.f32.mrb[0].mxu0
  %v1688 = vadd.f32 %v1596, %v1687
  %v1689 = vpop.f32.mrb[0].mxu0
  %v1690 = vpop.f32.mrb[0].mxu0
  %v1691 = vadd.f32 %v1596, %v1690
  %v1692 = vpop.f32.mrb[0].mxu0
  %1693 = vmatprep.mubr.bf16.mxu0 0
  %1694 = vmatmul.mubr.bf16.gmra.mrb[0].mxu0 %v1088
  %v1695 = vpop.f32.mrb[0].mxu0
  %v1696 = vadd.f32 %v1596, %v1695
  %v1697 = vpop.f32.mrb[0].mxu0
  %v1698 = vpop.f32.mrb[0].mxu0
  %v1699 = vadd.f32 %v1596, %v1698
  %v1700 = vpop.f32.mrb[0].mxu0
  %1701 = vmatprep.mubr.bf16.mxu0 0
  %1702 = vmatmul.mubr.bf16.gmra.mrb[0].mxu0 %v1089
  %v1703 = vpop.f32.mrb[0].mxu0
  %v1704 = vadd.f32 %v1596, %v1703
  %v1705 = vpop.f32.mrb[0].mxu0
  %v1706 = vpop.f32.mrb[0].mxu0
  %v1707 = vadd.f32 %v1596, %v1706
  %v1708 = vpop.f32.mrb[0].mxu0
  %1709 = vmatprep.mubr.bf16.mxu0 0
  %1710 = vmatmul.mubr.bf16.gmra.mrb[0].mxu0 %v1090
  %v1711 = vpop.f32.mrb[0].mxu0
  %v1712 = vadd.f32 %v1596, %v1711
  %v1713 = vpop.f32.mrb[0].mxu0
  %v1714 = vpop.f32.mrb[0].mxu0
  %v1715 = vadd.f32 %v1596, %v1714
  %v1716 = vpop.f32.mrb[0].mxu0
  %1717 = vmatprep.mubr.bf16.mxu0 0
  %1718 = vmatmul.mubr.bf16.gmra.mrb[0].mxu0 %v1091
  %v1719 = vpop.f32.mrb[0].mxu0
  %v1720 = vadd.f32 %v1596, %v1719
  %v1721 = vpop.f32.mrb[0].mxu0
  %v1722 = vpop.f32.mrb[0].mxu0
  %v1723 = vadd.f32 %v1596, %v1722
  %v1724 = vpop.f32.mrb[0].mxu0
  %1725 = vmatprep.mubr.bf16.mxu0 0
  %1726 = vmatmul.mubr.bf16.gmra.mrb[0].mxu0 %v1092
  %v1727 = vpop.f32.mrb[0].mxu0
  %v1728 = vadd.f32 %v1596, %v1727
  %v1729 = vpop.f32.mrb[0].mxu0
  %v1730 = vpop.f32.mrb[0].mxu0
  %v1731 = vadd.f32 %v1596, %v1730
  %v1732 = vpop.f32.mrb[0].mxu0
  %1733 = vdwg.mxu0
  %v1734 = vxor.u32 %v1680, 2147483648
  %v1735 = vxor.u32 %v1683, 2147483648
  %v1736 = vxor.u32 %v1688, 2147483648
  %v1737 = vxor.u32 %v1691, 2147483648
  %v1738 = vxor.u32 %v1696, 2147483648
  %v1739 = vxor.u32 %v1699, 2147483648
  %v1740 = vxor.u32 %v1704, 2147483648
  %v1741 = vxor.u32 %v1707, 2147483648
  %v1742 = vxor.u32 %v1712, 2147483648
  %v1743 = vxor.u32 %v1715, 2147483648
  %v1744 = vxor.u32 %v1720, 2147483648
  %v1745 = vxor.u32 %v1723, 2147483648
  %v1746 = vxor.u32 %v1728, 2147483648
  %v1747 = vxor.u32 %v1731, 2147483648
  %v1748 = vmul.f32 %v1734, 1.442695
  %v1749 = vpow.pop %v1748
  %v1750 = vmul.f32 %v1735, 1.442695
  %v1751 = vpow.pop %v1750
  %v1752 = vmul.f32 %v1736, 1.442695
  %v1753 = vpow.pop %v1752
  %v1754 = vmul.f32 %v1737, 1.442695
  %v1755 = vpow.pop %v1754
  %v1756 = vmul.f32 %v1738, 1.442695
  %v1757 = vpow.pop %v1756
  %v1758 = vmul.f32 %v1739, 1.442695
  %v1759 = vpow.pop %v1758
  %v1760 = vmul.f32 %v1740, 1.442695
  %v1761 = vpow.pop %v1760
  %v1762 = vmul.f32 %v1741, 1.442695
  %v1763 = vpow.pop %v1762
  %v1764 = vmul.f32 %v1742, 1.442695
  %v1765 = vpow.pop %v1764
  %v1766 = vmul.f32 %v1743, 1.442695
  %v1767 = vpow.pop %v1766
  %v1768 = vmul.f32 %v1744, 1.442695
  %v1769 = vpow.pop %v1768
  %v1770 = vmul.f32 %v1745, 1.442695
  %v1771 = vpow.pop %v1770
  %v1772 = vmul.f32 %v1746, 1.442695
  %v1773 = vpow.pop %v1772
  %v1774 = vmul.f32 %v1747, 1.442695
  %v1775 = vpow.pop %v1774
  %v1776 = vadd.f32 %v1749, 1.0
  %v1777 = vadd.f32 %v1751, 1.0
  %v1778 = vadd.f32 %v1753, 1.0
  %v1779 = vadd.f32 %v1755, 1.0
  %v1780 = vadd.f32 %v1757, 1.0
  %v1781 = vadd.f32 %v1759, 1.0
  %v1782 = vadd.f32 %v1761, 1.0
  %v1783 = vadd.f32 %v1763, 1.0
  %v1784 = vadd.f32 %v1765, 1.0
  %v1785 = vadd.f32 %v1767, 1.0
  %v1786 = vadd.f32 %v1769, 1.0
  %v1787 = vadd.f32 %v1771, 1.0
  %v1788 = vadd.f32 %v1773, 1.0
  %v1789 = vadd.f32 %v1775, 1.0
  %v1790 = vrcp.pop %v1776
  %v1791 = vmul.f32 1.0, %v1790
  %v1792 = vrcp.pop %v1777
  %v1793 = vmul.f32 1.0, %v1792
  %v1794 = vrcp.pop %v1778
  %v1795 = vmul.f32 1.0, %v1794
  %v1796 = vrcp.pop %v1779
  %v1797 = vmul.f32 1.0, %v1796
  %v1798 = vrcp.pop %v1780
  %v1799 = vmul.f32 1.0, %v1798
  %v1800 = vrcp.pop %v1781
  %v1801 = vmul.f32 1.0, %v1800
  %v1802 = vrcp.pop %v1782
  %v1803 = vmul.f32 1.0, %v1802
  %v1804 = vrcp.pop %v1783
  %v1805 = vmul.f32 1.0, %v1804
  %v1806 = vrcp.pop %v1784
  %v1807 = vmul.f32 1.0, %v1806
  %v1808 = vrcp.pop %v1785
  %v1809 = vmul.f32 1.0, %v1808
  %v1810 = vrcp.pop %v1786
  %v1811 = vmul.f32 1.0, %v1810
  %v1812 = vrcp.pop %v1787
  %v1813 = vmul.f32 1.0, %v1812
  %v1814 = vrcp.pop %v1788
  %v1815 = vmul.f32 1.0, %v1814
  %v1816 = vrcp.pop %v1789
  %v1817 = vmul.f32 1.0, %v1816
  %v1818 = vmul.f32 %v1680, %v1791
  %v1819 = vmul.f32 %v1683, %v1793
  %v1820 = vmul.f32 %v1688, %v1795
  %v1821 = vmul.f32 %v1691, %v1797
  %v1822 = vmul.f32 %v1696, %v1799
  %v1823 = vmul.f32 %v1699, %v1801
  %v1824 = vmul.f32 %v1704, %v1803
  %v1825 = vmul.f32 %v1707, %v1805
  %v1826 = vmul.f32 %v1712, %v1807
  %v1827 = vmul.f32 %v1715, %v1809
  %v1828 = vmul.f32 %v1720, %v1811
  %v1829 = vmul.f32 %v1723, %v1813
  %v1830 = vmul.f32 %v1728, %v1815
  %v1831 = vmul.f32 %v1731, %v1817
  %v1832 = vpack.c.bf16 %v1819, %v1818
  %v1833 = vpack.c.bf16 %v1821, %v1820
  %v1834 = vpack.c.bf16 %v1823, %v1822
  %v1835 = vpack.c.bf16 %v1825, %v1824
  %v1836 = vpack.c.bf16 %v1827, %v1826
  %v1837 = vpack.c.bf16 %v1829, %v1828
  %v1838 = vpack.c.bf16 %v1831, %v1830
  %s1839 = scalar_lea.vmem %s6, 128
  %v1840 = vld [vmem:[%s1839] sm:$0xff]
  %v1841 = vld [vmem:[%s1839 + $0x8] sm:$0xff]
  %v1842 = vld [vmem:[%s1839 + $0x10] sm:$0xff]
  %v1843 = vld [vmem:[%s1839 + $0x18] sm:$0xff]
  %v1844 = vld [vmem:[%s1839 + $0x20] sm:$0xff]
  %v1845 = vld [vmem:[%s1839 + $0x28] sm:$0xff]
  %v1846 = vld [vmem:[%s1839 + $0x30] sm:$0xff]
  %v1847 = vld [vmem:[%s1839 + $0x38] sm:$0xff]
  %v1848 = vld [vmem:[%s1839 + $0x40] sm:$0xff]
  %v1849 = vld [vmem:[%s1839 + $0x48] sm:$0xff]
  %v1850 = vld [vmem:[%s1839 + $0x50] sm:$0xff]
  %v1851 = vld [vmem:[%s1839 + $0x58] sm:$0xff]
  %v1852 = vld [vmem:[%s1839 + $0x60] sm:$0xff]
  %v1853 = vld [vmem:[%s1839 + $0x68] sm:$0xff]
  %v1854 = vld [vmem:[%s1839 + $0x70] sm:$0xff]
  %v1855 = vld [vmem:[%s1839 + $0x78] sm:$0xff]
  %v1856 = vlaneseq
  %v1857 = vshrl.u32 %v1856, 7
  %v1858 = vsub.s32 7, %v1857
  %v1859 = vrot.slane %v38, %v1858
  %v1860 = vlaneseq
  %v1861 = vshrl.u32 %v1860, 7
  %v1862 = vsub.s32 7, %v1861
  %v1863 = vrot.slane %v39, %v1862
  %v1880 = vunpack.c.l.b16 %v1840
  %v1881 = vunpack.c.h.b16 %v1840
  %v1882 = vunpack.c.l.b16 %v1841
  %v1883 = vunpack.c.h.b16 %v1841
  %v1884 = vunpack.c.l.b16 %v1842
  %v1885 = vunpack.c.h.b16 %v1842
  %v1886 = vunpack.c.l.b16 %v1843
  %v1887 = vunpack.c.h.b16 %v1843
  %v1888 = vunpack.c.l.b16 %v1844
  %v1889 = vunpack.c.h.b16 %v1844
  %v1890 = vunpack.c.l.b16 %v1845
  %v1891 = vunpack.c.h.b16 %v1845
  %v1892 = vunpack.c.l.b16 %v1846
  %v1893 = vunpack.c.h.b16 %v1846
  %v1894 = vunpack.c.l.b16 %v1847
  %v1895 = vunpack.c.h.b16 %v1847
  %v1896 = vunpack.c.l.b16 %v1848
  %v1897 = vunpack.c.h.b16 %v1848
  %v1898 = vunpack.c.l.b16 %v1849
  %v1899 = vunpack.c.h.b16 %v1849
  %v1900 = vunpack.c.l.b16 %v1850
  %v1901 = vunpack.c.h.b16 %v1850
  %v1902 = vunpack.c.l.b16 %v1851
  %v1903 = vunpack.c.h.b16 %v1851
  %v1904 = vunpack.c.l.b16 %v1852
  %v1905 = vunpack.c.h.b16 %v1852
  %v1906 = vunpack.c.l.b16 %v1853
  %v1907 = vunpack.c.h.b16 %v1853
  %v1908 = vunpack.c.l.b16 %v1854
  %v1909 = vunpack.c.h.b16 %v1854
  %v1910 = vunpack.c.l.b16 %v1855
  %v1911 = vunpack.c.h.b16 %v1855
  %v1912 = vpack.c.b16 %v1882, %v1880
  %v1913 = vpack.c.b16 %v1883, %v1881
  %v1914 = vpack.c.b16 %v1886, %v1884
  %v1915 = vpack.c.b16 %v1887, %v1885
  %v1916 = vpack.c.b16 %v1890, %v1888
  %v1917 = vpack.c.b16 %v1891, %v1889
  %v1918 = vpack.c.b16 %v1894, %v1892
  %v1919 = vpack.c.b16 %v1895, %v1893
  %v1920 = vpack.c.b16 %v1898, %v1896
  %v1921 = vpack.c.b16 %v1899, %v1897
  %v1922 = vpack.c.b16 %v1902, %v1900
  %v1923 = vpack.c.b16 %v1903, %v1901
  %v1924 = vpack.c.b16 %v1906, %v1904
  %v1925 = vpack.c.b16 %v1907, %v1905
  %v1926 = vpack.c.b16 %v1910, %v1908
  %v1927 = vpack.c.b16 %v1911, %v1909
  %1944 = vmatprep.subr.bf16.mxu0 %v1913
  %1945 = vmatpush1.bf16.msra.mxu0 %v1912
  %1946 = vmatprep.subr.bf16.mxu0 %v1915
  %1947 = vmatpush1.bf16.msra.mxu0 %v1914
  %1948 = vmatprep.subr.bf16.mxu0 %v1917
  %1949 = vmatpush1.bf16.msra.mxu0 %v1916
  %1950 = vmatprep.subr.bf16.mxu0 %v1919
  %1951 = vmatpush1.bf16.msra.mxu0 %v1918
  %1952 = vmatprep.subr.bf16.mxu0 %v1921
  %1953 = vmatpush1.bf16.msra.mxu0 %v1920
  %1954 = vmatprep.subr.bf16.mxu0 %v1923
  %1955 = vmatpush1.bf16.msra.mxu0 %v1922
  %1956 = vmatprep.subr.bf16.mxu0 %v1925
  %1957 = vmatpush1.bf16.msra.mxu0 %v1924
  %1958 = vmatprep.subr.bf16.mxu0 %v1927
  %1959 = vmatpush1.bf16.msra.mxu0 %v1926
  %1960 = vmatprep.subr.bf16.mxu0 0
  %1961 = vmatpush1.bf16.msra.mxu0 0
  %1962 = vmatprep.subr.bf16.mxu0 0
  %1963 = vmatpush1.bf16.msra.mxu0 0
  %1964 = vmatprep.subr.bf16.mxu0 0
  %1965 = vmatpush1.bf16.msra.mxu0 0
  %1966 = vmatprep.subr.bf16.mxu0 0
  %1967 = vmatpush1.bf16.msra.mxu0 0
  %1968 = vmatprep.subr.bf16.mxu0 0
  %1969 = vmatpush1.bf16.msra.mxu0 0
  %1970 = vmatprep.subr.bf16.mxu0 0
  %1971 = vmatpush1.bf16.msra.mxu0 0
  %1972 = vmatprep.subr.bf16.mxu0 0
  %1973 = vmatpush1.bf16.msra.mxu0 0
  %1974 = vmatprep.subr.bf16.mxu0 0
  %1975 = vmatpush1.bf16.msra.mxu0 0
  %1976 = vmatprep.mubr.bf16.mxu0 0
  %1977 = vmatmul.mubr.bf16.gmra.mrb[0].mxu0 %v1832
  %v1978 = vpop.f32.mrb[0].mxu0
  %v1979 = vpop.f32.mrb[0].mxu0
  %v1980 = vpop.f32.mrb[0].mxu0
  %v1981 = vpop.f32.mrb[0].mxu0
  %1982 = vmatprep.mubr.bf16.mxu0 0
  %1983 = vmatmul.mubr.bf16.gmra.mrb[0].mxu0 %v1833
  %v1984 = vpop.f32.mrb[0].mxu0
  %v1985 = vpop.f32.mrb[0].mxu0
  %v1986 = vpop.f32.mrb[0].mxu0
  %v1987 = vpop.f32.mrb[0].mxu0
  %1988 = vmatprep.mubr.bf16.mxu0 0
  %1989 = vmatmul.mubr.bf16.gmra.mrb[0].mxu0 %v1834
  %v1990 = vpop.f32.mrb[0].mxu0
  %v1991 = vpop.f32.mrb[0].mxu0
  %v1992 = vpop.f32.mrb[0].mxu0
  %v1993 = vpop.f32.mrb[0].mxu0
  %1994 = vmatprep.mubr.bf16.mxu0 0
  %1995 = vmatmul.mubr.bf16.gmra.mrb[0].mxu0 %v1835
  %v1996 = vpop.f32.mrb[0].mxu0
  %v1997 = vpop.f32.mrb[0].mxu0
  %v1998 = vpop.f32.mrb[0].mxu0
  %v1999 = vpop.f32.mrb[0].mxu0
  %2000 = vmatprep.mubr.bf16.mxu0 0
  %2001 = vmatmul.mubr.bf16.gmra.mrb[0].mxu0 %v1836
  %v2002 = vpop.f32.mrb[0].mxu0
  %v2003 = vpop.f32.mrb[0].mxu0
  %v2004 = vpop.f32.mrb[0].mxu0
  %v2005 = vpop.f32.mrb[0].mxu0
  %2006 = vmatprep.mubr.bf16.mxu0 0
  %2007 = vmatmul.mubr.bf16.gmra.mrb[0].mxu0 %v1837
  %v2008 = vpop.f32.mrb[0].mxu0
  %v2009 = vpop.f32.mrb[0].mxu0
  %v2010 = vpop.f32.mrb[0].mxu0
  %v2011 = vpop.f32.mrb[0].mxu0
  %2012 = vmatprep.mubr.bf16.mxu0 0
  %2013 = vmatmul.mubr.bf16.gmra.mrb[0].mxu0 %v1838
  %v2014 = vpop.f32.mrb[0].mxu0
  %v2015 = vadd.f32 %v1859, %v2014
  %v2016 = vpop.f32.mrb[0].mxu0
  %v2017 = vadd.f32 %v1863, %v2016
  %v2018 = vpop.f32.mrb[0].mxu0
  %v2019 = vadd.f32 %v1859, %v2018
  %v2020 = vpop.f32.mrb[0].mxu0
  %v2021 = vadd.f32 %v1863, %v2020
  %2022 = vdwg.mxu0
  %v2023 = vmul.f32 %v1510, 0.5
  %v2024 = vmul.f32 %v1514, 0.5
  %v2025 = vmul.f32 %v1520, 0.5
  %v2026 = vmul.f32 %v1524, 0.5
  %v2027 = vmul.f32 %v1530, 0.5
  %v2028 = vmul.f32 %v1534, 0.5
  %v2029 = vmul.f32 %v1540, 0.5
  %v2030 = vmul.f32 %v1544, 0.5
  %v2031 = vmul.f32 %v1550, 0.5
  %v2032 = vmul.f32 %v1554, 0.5
  %v2033 = vmul.f32 %v1560, 0.5
  %v2034 = vmul.f32 %v1564, 0.5
  %v2035 = vmul.f32 %v1570, 0.5
  %v2036 = vmul.f32 %v1574, 0.5
  %v2037 = vmul.f32 %v2023, 1.442695
  %v2038 = vpow.pop %v2037
  %v2039 = vmul.f32 %v2024, 1.442695
  %v2040 = vpow.pop %v2039
  %v2041 = vmul.f32 %v2025, 1.442695
  %v2042 = vpow.pop %v2041
  %v2043 = vmul.f32 %v2026, 1.442695
  %v2044 = vpow.pop %v2043
  %v2045 = vmul.f32 %v2027, 1.442695
  %v2046 = vpow.pop %v2045
  %v2047 = vmul.f32 %v2028, 1.442695
  %v2048 = vpow.pop %v2047
  %v2049 = vmul.f32 %v2029, 1.442695
  %v2050 = vpow.pop %v2049
  %v2051 = vmul.f32 %v2030, 1.442695
  %v2052 = vpow.pop %v2051
  %v2053 = vmul.f32 %v2031, 1.442695
  %v2054 = vpow.pop %v2053
  %v2055 = vmul.f32 %v2032, 1.442695
  %v2056 = vpow.pop %v2055
  %v2057 = vmul.f32 %v2033, 1.442695
  %v2058 = vpow.pop %v2057
  %v2059 = vmul.f32 %v2034, 1.442695
  %v2060 = vpow.pop %v2059
  %v2061 = vmul.f32 %v2035, 1.442695
  %v2062 = vpow.pop %v2061
  %v2063 = vmul.f32 %v2036, 1.442695
  %v2064 = vpow.pop %v2063
  %v2065 = vld [vmem:[%s3] sm:$0xff]
  %v2066 = vld [vmem:[%s3 + $0x8] sm:$0xff]
  %v2067 = vld [vmem:[%s3 + $0x10] sm:$0xff]
  %v2068 = vld [vmem:[%s3 + $0x18] sm:$0xff]
  %v2069 = vld [vmem:[%s3 + $0x20] sm:$0xff]
  %v2070 = vld [vmem:[%s3 + $0x28] sm:$0xff]
  %v2071 = vld [vmem:[%s3 + $0x30] sm:$0xff]
  %v2072 = vld [vmem:[%s3 + $0x38] sm:$0xff]
  %v2073 = vld [vmem:[%s3 + $0x40] sm:$0xff]
  %v2074 = vld [vmem:[%s3 + $0x48] sm:$0xff]
  %v2075 = vld [vmem:[%s3 + $0x50] sm:$0xff]
  %v2076 = vld [vmem:[%s3 + $0x58] sm:$0xff]
  %v2077 = vld [vmem:[%s3 + $0x60] sm:$0xff]
  %v2078 = vld [vmem:[%s3 + $0x68] sm:$0xff]
  %v2079 = vmul.f32 %v2038, %v2065
  %v2080 = vmul.f32 %v2040, %v2066
  %v2081 = vmul.f32 %v2042, %v2067
  %v2082 = vmul.f32 %v2044, %v2068
  %v2083 = vmul.f32 %v2046, %v2069
  %v2084 = vmul.f32 %v2048, %v2070
  %v2085 = vmul.f32 %v2050, %v2071
  %v2086 = vmul.f32 %v2052, %v2072
  %v2087 = vmul.f32 %v2054, %v2073
  %v2088 = vmul.f32 %v2056, %v2074
  %v2089 = vmul.f32 %v2058, %v2075
  %v2090 = vmul.f32 %v2060, %v2076
  %v2091 = vmul.f32 %v2062, %v2077
  %v2092 = vmul.f32 %v2064, %v2078
  %v2093 = vadd.f32 %v1508, %v2079
  %v2094 = vadd.f32 %v1512, %v2080
  %v2095 = vadd.f32 %v1518, %v2081
  %v2096 = vadd.f32 %v1522, %v2082
  %v2097 = vadd.f32 %v1528, %v2083
  %v2098 = vadd.f32 %v1532, %v2084
  %v2099 = vadd.f32 %v1538, %v2085
  %v2100 = vadd.f32 %v1542, %v2086
  %v2101 = vadd.f32 %v1548, %v2087
  %v2102 = vadd.f32 %v1552, %v2088
  %v2103 = vadd.f32 %v1558, %v2089
  %v2104 = vadd.f32 %v1562, %v2090
  %v2105 = vadd.f32 %v1568, %v2091
  %v2106 = vadd.f32 %v1572, %v2092
  %2107 = vst [vmem:[%s10] sm:$0xff] %v2093
  %2108 = vst [vmem:[%s10 + $0x8] sm:$0xff] %v2094
  %2109 = vst [vmem:[%s10 + $0x10] sm:$0xff] %v2095
  %2110 = vst [vmem:[%s10 + $0x18] sm:$0xff] %v2096
  %2111 = vst [vmem:[%s10 + $0x20] sm:$0xff] %v2097
  %2112 = vst [vmem:[%s10 + $0x28] sm:$0xff] %v2098
  %2113 = vst [vmem:[%s10 + $0x30] sm:$0xff] %v2099
  %2114 = vst [vmem:[%s10 + $0x38] sm:$0xff] %v2100
  %2115 = vst [vmem:[%s10 + $0x40] sm:$0xff] %v2101
  %2116 = vst [vmem:[%s10 + $0x48] sm:$0xff] %v2102
  %2117 = vst [vmem:[%s10 + $0x50] sm:$0xff] %v2103
  %2118 = vst [vmem:[%s10 + $0x58] sm:$0xff] %v2104
  %2119 = vst [vmem:[%s10 + $0x60] sm:$0xff] %v2105
  %2120 = vst [vmem:[%s10 + $0x68] sm:$0xff] %v2106
  %2121 = vst [vmem:[%s11] sm:$0xff] %v857
  %2122 = vst [vmem:[%s11 + $0x8] sm:$0xff] %v863
  %2123 = vst [vmem:[%s11 + $0x10] sm:$0xff] %v859
  %2124 = vst [vmem:[%s11 + $0x18] sm:$0xff] %v865
  %2125 = vst [vmem:[%s11 + $0x20] sm:$0xff] %v1568
  %2126 = vst [vmem:[%s11 + $0x28] sm:$0xff] %v1572
  %2127 = vst [vmem:[%s11 + $0x30] sm:$0xff] %v1570
  %2128 = vst [vmem:[%s11 + $0x38] sm:$0xff] %v1574
  %2129 = vst [vmem:[%s11 + $0x40] sm:$0xff] %v2015
  %2130 = vst [vmem:[%s11 + $0x48] sm:$0xff] %v2019
  %2131 = vst [vmem:[%s11 + $0x50] sm:$0xff] %v2017
  %2132 = vst [vmem:[%s11 + $0x58] sm:$0xff] %v2021
  // Predicated region
  $region42: #{vfsddpm_forward.1} parent=0 // pred_check
    _
  $region43: #{vfsddpm_forward.1} parent=0 // pred_check_branch
    %2134 = sbr.rel (0) target = $region45
  $region44: #{vfsddpm_forward.1} parent=0 // pred_region
    _
  $region45: #{vfsddpm_forward.1} parent=0 // pred_fallthru
    _
  // Predicated region
  $region46: #{vfsddpm_forward.1} parent=0 // pred_check
    _
  $region47: #{vfsddpm_forward.1} parent=0 // pred_check_branch
    %2136 = sbr.rel (0) target = $region49
  $region48: #{vfsddpm_forward.1} parent=0 // pred_region
    _
  $region49: #{vfsddpm_forward.1} parent=0 // pred_fallthru
    _
  // Predicated region
  $region50: #{vfsddpm_forward.1} parent=0 // pred_check
    _
  $region51: #{vfsddpm_forward.1} parent=0 // pred_check_branch
    %2138 = sbr.rel (0) target = $region53
  $region52: #{vfsddpm_forward.1} parent=0 // pred_region
    _
  $region53: #{vfsddpm_forward.1} parent=0 // pred_fallthru
    _
  // Predicated region
  $region54: #{vfsddpm_forward.1} parent=0 // pred_check
    _
  $region55: #{vfsddpm_forward.1} parent=0 // pred_check_branch
    %2140 = sbr.rel (0) target = $region57
  $region56: #{vfsddpm_forward.1} parent=0 // pred_region
    _
  $region57: #{vfsddpm_forward.1} parent=0 // pred_fallthru
    _

</llo_original>
